<compile_context>
chip_gen: v7x
topology: tpu7x:2x2x1
jax: 0.10.0
libtpu: 0.0.40
codegen_flags: <defaults>
</compile_context>

<pallas_src>
import functools

import jax
import jax.numpy as jnp
from jax import lax
from jax.experimental import pallas as pl
from jax.experimental.pallas import tpu as pltpu


# ----------------------------------------------------------------------------
# Kernel
# ----------------------------------------------------------------------------
def _double_conv_kernel(x_main_ref, x_top_ref, x_bot_ref, w1_ref, b1_ref,
                        w2_ref, b2_ref, o_ref, xpad_ref, mid_ref, *,
                        use_fat1, use_fat2, lane_dense):
    """One (batch tile, row tile) block per grid step.

    x_main_ref : (Nb, tile_h,   W, Cin)   tile rows (compute dtype, unpadded)
    x_top_ref  : (Nb, 2,        W, Cin)   2 rows above the tile (clamped idx)
    x_bot_ref  : (Nb, 2,        W, Cin)   2 rows below the tile (clamped idx)
    w1_ref     : (9*Cin,  Cout)           conv1 weights, BN1 scale folded in
    w2_ref     : (9*Cout, Cout)           conv2 weights, BN2 scale folded in
    b1_ref/b2_ref : (1, Cout) f32         folded BN biases
    o_ref      : (Nb, tile_h, W, Cout)    output tile      (or (Nb,tile_h,W*Cout))
    xpad_ref   : (Nb, tile_h+4, W+2, Cin) VMEM scratch, halo-padded input
    mid_ref    : (Nb, tile_h+2, W+2, Cout)VMEM scratch, padded conv1 output
    """
    r = pl.program_id(1)
    n_row_tiles = pl.num_programs(1)
    Nb, tile_h, W, Cin = x_main_ref.shape
    Cout = w1_ref.shape[1]
    cdt = xpad_ref.dtype

    # ---- assemble the zero-padded input tile in VMEM (replaces wrapper pad) --
    zcol_in = jnp.zeros((Nb, tile_h + 4, 1, Cin), cdt)
    xpad_ref[:, :, 0:1, :] = zcol_in                      # left W-halo column
    xpad_ref[:, :, W + 1:W + 2, :] = zcol_in              # right W-halo column
    xpad_ref[:, 2:tile_h + 2, 1:W + 1, :] = x_main_ref[...]
    xpad_ref[:, 0:2, 1:W + 1, :] = x_top_ref[...]         # halo from neighbour
    xpad_ref[:, tile_h + 2:tile_h + 4, 1:W + 1, :] = x_bot_ref[...]

    zrow_in = jnp.zeros((Nb, 2, W, Cin), cdt)

    @pl.when(r == 0)                                      # image top: zero pad
    def _():
        xpad_ref[:, 0:2, 1:W + 1, :] = zrow_in

    @pl.when(r == n_row_tiles - 1)                        # image bottom
    def _():
        xpad_ref[:, tile_h + 2:tile_h + 4, 1:W + 1, :] = zrow_in

    # ---- 3x3 conv + folded-BN bias + ReLU (two MXU strategies) ---------------
    def conv3x3_bias_relu(src_ref, h_out, w_ref, b_ref, use_fat):
        ck = src_ref.shape[-1]
        if use_fat:
            # Shallow stage: one fat matmul, K = 9*ck (< 128).
            v = src_ref[...]
            cols = jnp.concatenate([v[:, :, dx:dx + W, :] for dx in range(3)],
                                   axis=-1)               # (Nb, h_out+2, W, 3*ck)
            pats = jnp.concatenate([cols[:, dy:dy + h_out] for dy in range(3)],
                                   axis=-1)               # (Nb, h_out, W, 9*ck)
            y = jnp.dot(pats.reshape(Nb * h_out * W, 9 * ck), w_ref[...],
                        preferred_element_type=jnp.float32)
        else:
            # Wide stage: 9 accumulated matmuls over shifted Ref views (K = ck),
            # no im2col patch tensor in VMEM, no lane concats.
            y = jnp.zeros((Nb * h_out * W, Cout), jnp.float32)
            for dy in range(3):
                for dx in range(3):
                    tap = src_ref[:, dy:dy + h_out, dx:dx + W, :]
                    k0 = (dy * 3 + dx) * ck
                    y = y + jnp.dot(tap.reshape(Nb * h_out * W, ck),
                                    w_ref[k0:k0 + ck, :],
                                    preferred_element_type=jnp.float32)
        return jnp.maximum(y + b_ref[...], 0.0)           # f32 epilogue

    # conv1 over the tile rows plus a 1-row halo (so conv2 is exact at seams)
    y1 = conv3x3_bias_relu(xpad_ref, tile_h + 2, w1_ref, b1_ref, use_fat1)

    zcol_mid = jnp.zeros((Nb, tile_h + 2, 1, Cout), cdt)
    mid_ref[:, :, 0:1, :] = zcol_mid
    mid_ref[:, :, W + 1:W + 2, :] = zcol_mid
    mid_ref[:, :, 1:W + 1, :] = y1.reshape(Nb, tile_h + 2, W, Cout).astype(cdt)

    zrow_mid = jnp.zeros((Nb, 1, W + 2, Cout), cdt)

    @pl.when(r == 0)                                      # conv2 zero pad (top)
    def _():
        mid_ref[:, 0:1, :, :] = zrow_mid

    @pl.when(r == n_row_tiles - 1)                        # conv2 zero pad (bot)
    def _():
        mid_ref[:, tile_h + 1:tile_h + 2, :, :] = zrow_mid

    y2 = conv3x3_bias_relu(mid_ref, tile_h, w2_ref, b2_ref, use_fat2)
    if lane_dense:
        o_ref[...] = y2.reshape(Nb, tile_h, W * Cout).astype(o_ref.dtype)
    else:
        o_ref[...] = y2.reshape(Nb, tile_h, W, Cout).astype(o_ref.dtype)


# ----------------------------------------------------------------------------
# Tile-size heuristics
# ----------------------------------------------------------------------------
def _step_vmem_bytes(block_n, tile_h, W, Cin, Cout, csize):
    """Rough per-grid-step VMEM footprint (underestimates vreg padding)."""
    xin = 2 * block_n * (tile_h + 4) * W * Cin * csize          # dbl-buffered in
    xpad = block_n * (tile_h + 4) * (W + 2) * Cin * csize
    mid = block_n * (tile_h + 2) * (W + 2) * Cout * csize
    outb = 2 * block_n * tile_h * W * Cout * 4                  # dbl-buffered out
    pats = block_n * (tile_h + 2) * W * 9 * max(Cin, Cout) * csize
    acc = block_n * (tile_h + 2) * W * Cout * 4
    return xin + xpad + mid + outb + pats + acc


def _default_tile_h(H, W, Cin, Cout, block_n, csize, vmem_limit_bytes):
    """Largest even row-tile that gives >=2 row tiles and fits the VMEM budget."""
    budget = vmem_limit_bytes // 2
    cands = [d for d in range(H // 2, 1, -1) if H % d == 0 and d % 2 == 0]
    for d in cands:
        if _step_vmem_bytes(block_n, d, W, Cin, Cout, csize) <= budget:
            return d
    return cands[-1] if cands else H


# ----------------------------------------------------------------------------
# Wrappers
# ----------------------------------------------------------------------------
def double_conv_pallas_nhwc(x_nhwc, w1, g1, be1, m1, v1, w2, g2, be2, m2, v2,
                            eps=1e-5, block_n=1, tile_h=None,
                            compute_dtype=jnp.bfloat16, out_dtype=jnp.float32,
                            matmul_path="auto", lane_dense_out=False,
                            vmem_limit_bytes=48 * 1024 * 1024):
    """NHWC-native DoubleConv.  x_nhwc: (N, H, W, Cin).  w*: (Cout, Cin, 3, 3).

    compute_dtype feeds the MXU (bf16 default — native path on v5e/v6e/v7x;
    accumulation and the folded-BN/ReLU epilogue stay in f32).
    matmul_path: "auto" | "fat" | "accum".
    """
    N, H, W, Cin = x_nhwc.shape
    Cout = w1.shape[0]
    csize = jnp.dtype(compute_dtype).itemsize
    assert N % block_n == 0, "block_n must divide the batch size"
    assert H % 2 == 0, "even H assumed (2-row halo blocks)"

    if tile_h is None:
        tile_h = _default_tile_h(H, W, Cin, Cout, block_n, csize,
                                 vmem_limit_bytes)
    assert H % tile_h == 0 and tile_h % 2 == 0

    use_fat1 = matmul_path == "fat" or (matmul_path == "auto" and 9 * Cin < 128)
    use_fat2 = matmul_path == "fat" or (matmul_path == "auto" and 9 * Cout < 128)
    lane_dense = (bool(lane_dense_out) and Cout < 128
                  and (W * Cout) % 128 == 0
                  and (tile_h % 8 == 0 or tile_h == H))

    # ---- fold eval-mode BatchNorm: scale into the conv weights, bias separate
    s1 = g1 / jnp.sqrt(v1 + eps)
    b1 = (be1 - m1 * s1).reshape(1, Cout).astype(jnp.float32)
    s2 = g2 / jnp.sqrt(v2 + eps)
    b2 = (be2 - m2 * s2).reshape(1, Cout).astype(jnp.float32)
    # (Cout, Cin, 3, 3) -> (ky, kx, cin, cout) -> (9*Cin, Cout)
    w1_f = (jnp.transpose(w1, (2, 3, 1, 0)).reshape(9 * Cin, Cout)
            * s1[None, :]).astype(compute_dtype)
    w2_f = (jnp.transpose(w2, (2, 3, 1, 0)).reshape(9 * Cout, Cout)
            * s2[None, :]).astype(compute_dtype)

    x = x_nhwc.astype(compute_dtype)       # halves HBM traffic in the bf16 path

    grid = (N // block_n, H // tile_h)
    th2 = tile_h // 2

    in_specs = [
        # tile rows
        pl.BlockSpec((block_n, tile_h, W, Cin), lambda n, r: (n, r, 0, 0)),
        # 2 rows above the tile (clamped at the image top; zeroed in-kernel)
        pl.BlockSpec((block_n, 2, W, Cin),
                     lambda n, r: (n, jnp.maximum(r * th2 - 1, 0), 0, 0)),
        # 2 rows below the tile (clamped at the image bottom; zeroed in-kernel)
        pl.BlockSpec((block_n, 2, W, Cin),
                     lambda n, r: (n, jnp.minimum((r + 1) * th2, H // 2 - 1),
                                   0, 0)),
        pl.BlockSpec((9 * Cin, Cout), lambda n, r: (0, 0)),
        pl.BlockSpec((1, Cout), lambda n, r: (0, 0)),
        pl.BlockSpec((9 * Cout, Cout), lambda n, r: (0, 0)),
        pl.BlockSpec((1, Cout), lambda n, r: (0, 0)),
    ]
    if lane_dense:
        out_shape = jax.ShapeDtypeStruct((N, H, W * Cout), out_dtype)
        out_spec = pl.BlockSpec((block_n, tile_h, W * Cout),
                                lambda n, r: (n, r, 0))
    else:
        out_shape = jax.ShapeDtypeStruct((N, H, W, Cout), out_dtype)
        out_spec = pl.BlockSpec((block_n, tile_h, W, Cout),
                                lambda n, r: (n, r, 0, 0))

    flops = 2 * N * H * W * 9 * (Cin * Cout + Cout * Cout)
    bytes_accessed = (N * H * W * Cin * csize
                      + N * H * W * Cout * jnp.dtype(out_dtype).itemsize
                      + (9 * Cin * Cout + 9 * Cout * Cout) * csize
                      + 2 * Cout * 4)
    cost = pl.CostEstimate(flops=flops, transcendentals=0,
                           bytes_accessed=bytes_accessed)

    kernel = functools.partial(_double_conv_kernel, use_fat1=use_fat1,
                               use_fat2=use_fat2, lane_dense=lane_dense)

    out = pl.pallas_call(
        kernel,
        out_shape=out_shape,
        grid_spec=pltpu.PrefetchScalarGridSpec(
            num_scalar_prefetch=0,
            grid=grid,
            in_specs=in_specs,
            out_specs=out_spec,
            scratch_shapes=[
                pltpu.VMEM((block_n, tile_h + 4, W + 2, Cin), compute_dtype),
                pltpu.VMEM((block_n, tile_h + 2, W + 2, Cout), compute_dtype),
            ],
        ),
        compiler_params=pltpu.CompilerParams(
            dimension_semantics=("parallel", "parallel"),
            vmem_limit_bytes=vmem_limit_bytes),
        cost_estimate=cost,
    )(x, x, x, w1_f, b1, w2_f, b2)

    if lane_dense:
        out = out.reshape(N, H, W, Cout)    # free HBM-level reshape
    return out


def double_conv_pallas(x_nchw, *args, **kwargs):
    """NCHW wrapper matching the PyTorch module interface.

    Prefer `double_conv_pallas_nhwc` in an NHWC model to avoid the two boundary
    transposes (each is a full HBM read+write of the activation).
    """
    x = jnp.transpose(x_nchw, (0, 2, 3, 1))
    y = double_conv_pallas_nhwc(x, *args, **kwargs)
    return jnp.transpose(y, (0, 3, 1, 2))


# ----------------------------------------------------------------------------
# Pure-JAX reference (PyTorch eval-mode semantics, NCHW)
# ----------------------------------------------------------------------------
def _reference(x_nchw, w1, g1, be1, m1, v1, w2, g2, be2, m2, v2, eps=1e-5):
    def conv(x, w):
        return lax.conv_general_dilated(
            x, w, window_strides=(1, 1), padding=((1, 1), (1, 1)),
            dimension_numbers=("NCHW", "OIHW", "NCHW"))

    def bn(x, g, b, m, v):
        g, b, m, v = (t.reshape(1, -1, 1, 1) for t in (g, b, m, v))
        return (x - m) / jnp.sqrt(v + eps) * g + b

    y = jnp.maximum(bn(conv(x_nchw, w1), g1, be1, m1, v1), 0.0)
    return jnp.maximum(bn(conv(y, w2), g2, be2, m2, v2), 0.0)


if __name__ == "__main__":
    N, Cin, Cout, H, W = 2, 4, 8, 16, 16
    key = jax.random.PRNGKey(0)
    ks = jax.random.split(key, 8)

    x = jax.random.normal(ks[0], (N, Cin, H, W), jnp.float32)
    w1 = jax.random.normal(ks[1], (Cout, Cin, 3, 3), jnp.float32) * 0.2
    w2 = jax.random.normal(ks[2], (Cout, Cout, 3, 3), jnp.float32) * 0.2

    g1 = jax.random.uniform(ks[3], (Cout,), jnp.float32, 0.5, 1.5)
    be1 = jax.random.normal(ks[4], (Cout,), jnp.float32) * 0.1
    m1 = jax.random.normal(ks[5], (Cout,), jnp.float32) * 0.1
    v1 = jax.random.uniform(ks[6], (Cout,), jnp.float32, 0.5, 1.5)

    g2 = jnp.ones((Cout,), jnp.float32) * 1.1
    be2 = jnp.ones((Cout,), jnp.float32) * 0.05
    m2 = jnp.zeros((Cout,), jnp.float32)
    v2 = jax.random.uniform(ks[7], (Cout,), jnp.float32, 0.5, 1.5)

    args = (x, w1, g1, be1, m1, v1, w2, g2, be2, m2, v2)
    ref = _reference(*args)

    # f32 MXU path, auto (fat) matmul strategy — tight tolerance.
    out_f32 = jax.jit(functools.partial(
        double_conv_pallas, compute_dtype=jnp.float32))(*args)
    out_f32 = jax.block_until_ready(out_f32)
    assert out_f32.shape == (N, Cout, H, W)
    assert jnp.allclose(out_f32, ref, atol=2e-3, rtol=1e-3), \
        "f32 (fat) kernel mismatch vs reference"

    # f32, forced accumulated-matmul path (the C >= 128 code path).
    out_acc = jax.jit(functools.partial(
        double_conv_pallas, compute_dtype=jnp.float32,
        matmul_path="accum"))(*args)
    out_acc = jax.block_until_ready(out_acc)
    assert jnp.allclose(out_acc, ref, atol=2e-3, rtol=1e-3), \
        "f32 (accum) kernel mismatch vs reference"

    # Default bf16 MXU path (f32 accumulation + epilogue) — looser tolerance.
    out_bf16 = jax.jit(double_conv_pallas)(*args)
    out_bf16 = jax.block_until_ready(out_bf16)
    assert jnp.allclose(out_bf16, ref, atol=1.5e-1, rtol=5e-2), \
        "bf16 kernel mismatch vs reference"

    print("KERNEL_OK")
</pallas_src>

<mosaic_0001>
module attributes {stable_mosaic.version = 11 : i64} {
  func.func @_double_conv_kernel(%arg0: i32, %arg1: i32, %arg2: memref<1x8x16x4xf32, #tpu.memory_space<vmem>>, %arg3: memref<1x2x16x4xf32, #tpu.memory_space<vmem>>, %arg4: memref<1x2x16x4xf32, #tpu.memory_space<vmem>>, %arg5: memref<36x8xf32, #tpu.memory_space<vmem>>, %arg6: memref<1x8xf32, #tpu.memory_space<vmem>>, %arg7: memref<72x8xf32, #tpu.memory_space<vmem>>, %arg8: memref<1x8xf32, #tpu.memory_space<vmem>>, %arg9: memref<1x8x16x8xf32, #tpu.memory_space<vmem>>, %arg10: memref<1x12x18x4xf32, #tpu.memory_space<vmem>>, %arg11: memref<1x10x18x8xf32, #tpu.memory_space<vmem>>) attributes {dimension_semantics = [#tpu.dimension_semantics<parallel>, #tpu.dimension_semantics<parallel>], iteration_bounds = array<i64: 2, 2>, scalar_prefetch = 0 : i64, scratch_operands = 2 : i64, tpu.core_type = #tpu.core_type<tc>, window_params = [{transform_indices = @transform_0, window_bounds = array<i64: 1, 8, 16, 4>}, {transform_indices = @transform_1, window_bounds = array<i64: 1, 2, 16, 4>}, {transform_indices = @transform_2, window_bounds = array<i64: 1, 2, 16, 4>}, {pipeline_mode = #tpu.pipeline_mode<synchronous>, transform_indices = @transform_3, window_bounds = array<i64: 36, 8>}, {pipeline_mode = #tpu.pipeline_mode<synchronous>, transform_indices = @transform_4, window_bounds = array<i64: 1, 8>}, {pipeline_mode = #tpu.pipeline_mode<synchronous>, transform_indices = @transform_5, window_bounds = array<i64: 72, 8>}, {pipeline_mode = #tpu.pipeline_mode<synchronous>, transform_indices = @transform_6, window_bounds = array<i64: 1, 8>}, {transform_indices = @transform_7, window_bounds = array<i64: 1, 8, 16, 8>}]} {
    %cst = arith.constant 0.000000e+00 : f32
    %0 = vector.broadcast %cst : f32 to vector<1x12x1x4xf32>
    %c0 = arith.constant 0 : index
    %c0_0 = arith.constant 0 : index
    %c0_1 = arith.constant 0 : index
    %c0_2 = arith.constant 0 : index
    %1 = vector.load %arg10[%c0, %c0_0, %c0_1, %c0_2] : memref<1x12x18x4xf32, #tpu.memory_space<vmem>>, vector<1x12x1x4xf32>
    tpu.vector_store %arg10[%c0, %c0_0, %c0_1, %c0_2], %0 {strides = array<i32>} : memref<1x12x18x4xf32, #tpu.memory_space<vmem>>, vector<1x12x1x4xf32>,
    %c0_3 = arith.constant 0 : index
    %c0_4 = arith.constant 0 : index
    %c17 = arith.constant 17 : index
    %c0_5 = arith.constant 0 : index
    %2 = vector.load %arg10[%c0_3, %c0_4, %c17, %c0_5] : memref<1x12x18x4xf32, #tpu.memory_space<vmem>>, vector<1x12x1x4xf32>
    tpu.vector_store %arg10[%c0_3, %c0_4, %c17, %c0_5], %0 {strides = array<i32>} : memref<1x12x18x4xf32, #tpu.memory_space<vmem>>, vector<1x12x1x4xf32>,
    %c0_6 = arith.constant 0 : index
    %c0_7 = arith.constant 0 : index
    %c0_8 = arith.constant 0 : index
    %c0_9 = arith.constant 0 : index
    %3 = vector.load %arg2[%c0_6, %c0_7, %c0_8, %c0_9] : memref<1x8x16x4xf32, #tpu.memory_space<vmem>>, vector<1x8x16x4xf32>
    %c0_10 = arith.constant 0 : index
    %c2 = arith.constant 2 : index
    %c1 = arith.constant 1 : index
    %c0_11 = arith.constant 0 : index
    %4 = vector.load %arg10[%c0_10, %c2, %c1, %c0_11] : memref<1x12x18x4xf32, #tpu.memory_space<vmem>>, vector<1x8x16x4xf32>
    tpu.vector_store %arg10[%c0_10, %c2, %c1, %c0_11], %3 {strides = array<i32>} : memref<1x12x18x4xf32, #tpu.memory_space<vmem>>, vector<1x8x16x4xf32>,
    %c0_12 = arith.constant 0 : index
    %c0_13 = arith.constant 0 : index
    %c0_14 = arith.constant 0 : index
    %c0_15 = arith.constant 0 : index
    %5 = vector.load %arg3[%c0_12, %c0_13, %c0_14, %c0_15] : memref<1x2x16x4xf32, #tpu.memory_space<vmem>>, vector<1x2x16x4xf32>
    %c0_16 = arith.constant 0 : index
    %c0_17 = arith.constant 0 : index
    %c1_18 = arith.constant 1 : index
    %c0_19 = arith.constant 0 : index
    %6 = vector.load %arg10[%c0_16, %c0_17, %c1_18, %c0_19] : memref<1x12x18x4xf32, #tpu.memory_space<vmem>>, vector<1x2x16x4xf32>
    tpu.vector_store %arg10[%c0_16, %c0_17, %c1_18, %c0_19], %5 {strides = array<i32>} : memref<1x12x18x4xf32, #tpu.memory_space<vmem>>, vector<1x2x16x4xf32>,
    %c0_20 = arith.constant 0 : index
    %c0_21 = arith.constant 0 : index
    %c0_22 = arith.constant 0 : index
    %c0_23 = arith.constant 0 : index
    %7 = vector.load %arg4[%c0_20, %c0_21, %c0_22, %c0_23] : memref<1x2x16x4xf32, #tpu.memory_space<vmem>>, vector<1x2x16x4xf32>
    %c0_24 = arith.constant 0 : index
    %c10 = arith.constant 10 : index
    %c1_25 = arith.constant 1 : index
    %c0_26 = arith.constant 0 : index
    %8 = vector.load %arg10[%c0_24, %c10, %c1_25, %c0_26] : memref<1x12x18x4xf32, #tpu.memory_space<vmem>>, vector<1x2x16x4xf32>
    tpu.vector_store %arg10[%c0_24, %c10, %c1_25, %c0_26], %7 {strides = array<i32>} : memref<1x12x18x4xf32, #tpu.memory_space<vmem>>, vector<1x2x16x4xf32>,
    %cst_27 = arith.constant 0.000000e+00 : f32
    %9 = vector.broadcast %cst_27 : f32 to vector<1x2x16x4xf32>
    %c0_i32 = arith.constant 0 : i32
    %10 = arith.cmpi eq, %arg1, %c0_i32 : i32
    %11 = arith.extui %10 : i1 to i32
    %c0_i32_28 = arith.constant 0 : i32
    %12 = arith.cmpi ne, %11, %c0_i32_28 : i32
    scf.if %12 {
      %c0_72 = arith.constant 0 : index
      %c0_73 = arith.constant 0 : index
      %c1_74 = arith.constant 1 : index
      %c0_75 = arith.constant 0 : index
      %64 = vector.load %arg10[%c0_72, %c0_73, %c1_74, %c0_75] : memref<1x12x18x4xf32, #tpu.memory_space<vmem>>, vector<1x2x16x4xf32>
      tpu.vector_store %arg10[%c0_72, %c0_73, %c1_74, %c0_75], %9 {strides = array<i32>} : memref<1x12x18x4xf32, #tpu.memory_space<vmem>>, vector<1x2x16x4xf32>,
    } else {
    }
    %c1_i32 = arith.constant 1 : i32
    %13 = arith.cmpi eq, %arg1, %c1_i32 : i32
    %14 = arith.extui %13 : i1 to i32
    %c0_i32_29 = arith.constant 0 : i32
    %15 = arith.cmpi ne, %14, %c0_i32_29 : i32
    scf.if %15 {
      %c0_72 = arith.constant 0 : index
      %c10_73 = arith.constant 10 : index
      %c1_74 = arith.constant 1 : index
      %c0_75 = arith.constant 0 : index
      %64 = vector.load %arg10[%c0_72, %c10_73, %c1_74, %c0_75] : memref<1x12x18x4xf32, #tpu.memory_space<vmem>>, vector<1x2x16x4xf32>
      tpu.vector_store %arg10[%c0_72, %c10_73, %c1_74, %c0_75], %9 {strides = array<i32>} : memref<1x12x18x4xf32, #tpu.memory_space<vmem>>, vector<1x2x16x4xf32>,
    } else {
    }
    %c0_30 = arith.constant 0 : index
    %c0_31 = arith.constant 0 : index
    %c0_32 = arith.constant 0 : index
    %c0_33 = arith.constant 0 : index
    %16 = vector.load %arg10[%c0_30, %c0_31, %c0_32, %c0_33] : memref<1x12x18x4xf32, #tpu.memory_space<vmem>>, vector<1x12x18x4xf32>
    %17 = vector.extract_strided_slice %16 {offsets = [0, 0, 0, 0], sizes = [1, 12, 16, 4], strides = [1, 1, 1, 1]} : vector<1x12x18x4xf32> to vector<1x12x16x4xf32>
    %18 = vector.extract_strided_slice %16 {offsets = [0, 0, 1, 0], sizes = [1, 12, 16, 4], strides = [1, 1, 1, 1]} : vector<1x12x18x4xf32> to vector<1x12x16x4xf32>
    %19 = vector.extract_strided_slice %16 {offsets = [0, 0, 2, 0], sizes = [1, 12, 16, 4], strides = [1, 1, 1, 1]} : vector<1x12x18x4xf32> to vector<1x12x16x4xf32>
    %20 = tpu.concatenate %17, %18, %19 in 3 : vector<1x12x16x4xf32>, vector<1x12x16x4xf32>, vector<1x12x16x4xf32> -> vector<1x12x16x12xf32>
    %21 = vector.extract_strided_slice %20 {offsets = [0, 0, 0, 0], sizes = [1, 10, 16, 12], strides = [1, 1, 1, 1]} : vector<1x12x16x12xf32> to vector<1x10x16x12xf32>
    %22 = vector.extract_strided_slice %20 {offsets = [0, 1, 0, 0], sizes = [1, 10, 16, 12], strides = [1, 1, 1, 1]} : vector<1x12x16x12xf32> to vector<1x10x16x12xf32>
    %23 = vector.extract_strided_slice %20 {offsets = [0, 2, 0, 0], sizes = [1, 10, 16, 12], strides = [1, 1, 1, 1]} : vector<1x12x16x12xf32> to vector<1x10x16x12xf32>
    %24 = tpu.concatenate %21, %22, %23 in 3 : vector<1x10x16x12xf32>, vector<1x10x16x12xf32>, vector<1x10x16x12xf32> -> vector<1x10x16x36xf32>
    %25 = vector.shape_cast %24 : vector<1x10x16x36xf32> to vector<160x36xf32>
    %c0_34 = arith.constant 0 : index
    %c0_35 = arith.constant 0 : index
    %26 = vector.load %arg5[%c0_34, %c0_35] : memref<36x8xf32, #tpu.memory_space<vmem>>, vector<36x8xf32>
    %cst_36 = arith.constant dense<0.000000e+00> : vector<160x8xf32>
    %27 = tpu.matmul %25, %26, %cst_36 {dimension_numbers = #tpu.dot_dimension_numbers<[1], [0], [0], [1], [0, 0, 1, 1], [], []>} : vector<160x36xf32>, vector<36x8xf32>, vector<160x8xf32> -> vector<160x8xf32>
    %c0_37 = arith.constant 0 : index
    %c0_38 = arith.constant 0 : index
    %28 = vector.load %arg6[%c0_37, %c0_38] : memref<1x8xf32, #tpu.memory_space<vmem>>, vector<1x8xf32>
    %29 = vector.broadcast %28 : vector<1x8xf32> to vector<160x8xf32>
    %30 = arith.addf %27, %29 : vector<160x8xf32>
    %cst_39 = arith.constant 0.000000e+00 : f32
    %31 = vector.broadcast %cst_39 : f32 to vector<160x8xf32>
    %32 = arith.maximumf %30, %31 : vector<160x8xf32>
    %cst_40 = arith.constant 0.000000e+00 : f32
    %33 = vector.broadcast %cst_40 : f32 to vector<1x10x1x8xf32>
    %c0_41 = arith.constant 0 : index
    %c0_42 = arith.constant 0 : index
    %c0_43 = arith.constant 0 : index
    %c0_44 = arith.constant 0 : index
    %34 = vector.load %arg11[%c0_41, %c0_42, %c0_43, %c0_44] : memref<1x10x18x8xf32, #tpu.memory_space<vmem>>, vector<1x10x1x8xf32>
    tpu.vector_store %arg11[%c0_41, %c0_42, %c0_43, %c0_44], %33 {strides = array<i32>} : memref<1x10x18x8xf32, #tpu.memory_space<vmem>>, vector<1x10x1x8xf32>,
    %c0_45 = arith.constant 0 : index
    %c0_46 = arith.constant 0 : index
    %c17_47 = arith.constant 17 : index
    %c0_48 = arith.constant 0 : index
    %35 = vector.load %arg11[%c0_45, %c0_46, %c17_47, %c0_48] : memref<1x10x18x8xf32, #tpu.memory_space<vmem>>, vector<1x10x1x8xf32>
    tpu.vector_store %arg11[%c0_45, %c0_46, %c17_47, %c0_48], %33 {strides = array<i32>} : memref<1x10x18x8xf32, #tpu.memory_space<vmem>>, vector<1x10x1x8xf32>,
    %36 = vector.shape_cast %32 : vector<160x8xf32> to vector<1x10x16x8xf32>
    %c0_49 = arith.constant 0 : index
    %c0_50 = arith.constant 0 : index
    %c1_51 = arith.constant 1 : index
    %c0_52 = arith.constant 0 : index
    %37 = vector.load %arg11[%c0_49, %c0_50, %c1_51, %c0_52] : memref<1x10x18x8xf32, #tpu.memory_space<vmem>>, vector<1x10x16x8xf32>
    tpu.vector_store %arg11[%c0_49, %c0_50, %c1_51, %c0_52], %36 {strides = array<i32>} : memref<1x10x18x8xf32, #tpu.memory_space<vmem>>, vector<1x10x16x8xf32>,
    %cst_53 = arith.constant 0.000000e+00 : f32
    %38 = vector.broadcast %cst_53 : f32 to vector<1x1x18x8xf32>
    %c0_i32_54 = arith.constant 0 : i32
    %39 = arith.cmpi eq, %arg1, %c0_i32_54 : i32
    %40 = arith.extui %39 : i1 to i32
    %c0_i32_55 = arith.constant 0 : i32
    %41 = arith.cmpi ne, %40, %c0_i32_55 : i32
    scf.if %41 {
      %c0_72 = arith.constant 0 : index
      %c0_73 = arith.constant 0 : index
      %c0_74 = arith.constant 0 : index
      %c0_75 = arith.constant 0 : index
      %64 = vector.load %arg11[%c0_72, %c0_73, %c0_74, %c0_75] : memref<1x10x18x8xf32, #tpu.memory_space<vmem>>, vector<1x1x18x8xf32>
      tpu.vector_store %arg11[%c0_72, %c0_73, %c0_74, %c0_75], %38 {strides = array<i32>} : memref<1x10x18x8xf32, #tpu.memory_space<vmem>>, vector<1x1x18x8xf32>,
    } else {
    }
    %c1_i32_56 = arith.constant 1 : i32
    %42 = arith.cmpi eq, %arg1, %c1_i32_56 : i32
    %43 = arith.extui %42 : i1 to i32
    %c0_i32_57 = arith.constant 0 : i32
    %44 = arith.cmpi ne, %43, %c0_i32_57 : i32
    scf.if %44 {
      %c0_72 = arith.constant 0 : index
      %c9 = arith.constant 9 : index
      %c0_73 = arith.constant 0 : index
      %c0_74 = arith.constant 0 : index
      %64 = vector.load %arg11[%c0_72, %c9, %c0_73, %c0_74] : memref<1x10x18x8xf32, #tpu.memory_space<vmem>>, vector<1x1x18x8xf32>
      tpu.vector_store %arg11[%c0_72, %c9, %c0_73, %c0_74], %38 {strides = array<i32>} : memref<1x10x18x8xf32, #tpu.memory_space<vmem>>, vector<1x1x18x8xf32>,
    } else {
    }
    %c0_58 = arith.constant 0 : index
    %c0_59 = arith.constant 0 : index
    %c0_60 = arith.constant 0 : index
    %c0_61 = arith.constant 0 : index
    %45 = vector.load %arg11[%c0_58, %c0_59, %c0_60, %c0_61] : memref<1x10x18x8xf32, #tpu.memory_space<vmem>>, vector<1x10x18x8xf32>
    %46 = vector.extract_strided_slice %45 {offsets = [0, 0, 0, 0], sizes = [1, 10, 16, 8], strides = [1, 1, 1, 1]} : vector<1x10x18x8xf32> to vector<1x10x16x8xf32>
    %47 = vector.extract_strided_slice %45 {offsets = [0, 0, 1, 0], sizes = [1, 10, 16, 8], strides = [1, 1, 1, 1]} : vector<1x10x18x8xf32> to vector<1x10x16x8xf32>
    %48 = vector.extract_strided_slice %45 {offsets = [0, 0, 2, 0], sizes = [1, 10, 16, 8], strides = [1, 1, 1, 1]} : vector<1x10x18x8xf32> to vector<1x10x16x8xf32>
    %49 = tpu.concatenate %46, %47, %48 in 3 : vector<1x10x16x8xf32>, vector<1x10x16x8xf32>, vector<1x10x16x8xf32> -> vector<1x10x16x24xf32>
    %50 = vector.extract_strided_slice %49 {offsets = [0, 0, 0, 0], sizes = [1, 8, 16, 24], strides = [1, 1, 1, 1]} : vector<1x10x16x24xf32> to vector<1x8x16x24xf32>
    %51 = vector.extract_strided_slice %49 {offsets = [0, 1, 0, 0], sizes = [1, 8, 16, 24], strides = [1, 1, 1, 1]} : vector<1x10x16x24xf32> to vector<1x8x16x24xf32>
    %52 = vector.extract_strided_slice %49 {offsets = [0, 2, 0, 0], sizes = [1, 8, 16, 24], strides = [1, 1, 1, 1]} : vector<1x10x16x24xf32> to vector<1x8x16x24xf32>
    %53 = tpu.concatenate %50, %51, %52 in 3 : vector<1x8x16x24xf32>, vector<1x8x16x24xf32>, vector<1x8x16x24xf32> -> vector<1x8x16x72xf32>
    %54 = vector.shape_cast %53 : vector<1x8x16x72xf32> to vector<128x72xf32>
    %c0_62 = arith.constant 0 : index
    %c0_63 = arith.constant 0 : index
    %55 = vector.load %arg7[%c0_62, %c0_63] : memref<72x8xf32, #tpu.memory_space<vmem>>, vector<72x8xf32>
    %cst_64 = arith.constant dense<0.000000e+00> : vector<128x8xf32>
    %56 = tpu.matmul %54, %55, %cst_64 {dimension_numbers = #tpu.dot_dimension_numbers<[1], [0], [0], [1], [0, 0, 1, 1], [], []>} : vector<128x72xf32>, vector<72x8xf32>, vector<128x8xf32> -> vector<128x8xf32>
    %c0_65 = arith.constant 0 : index
    %c0_66 = arith.constant 0 : index
    %57 = vector.load %arg8[%c0_65, %c0_66] : memref<1x8xf32, #tpu.memory_space<vmem>>, vector<1x8xf32>
    %58 = vector.broadcast %57 : vector<1x8xf32> to vector<128x8xf32>
    %59 = arith.addf %56, %58 : vector<128x8xf32>
    %cst_67 = arith.constant 0.000000e+00 : f32
    %60 = vector.broadcast %cst_67 : f32 to vector<128x8xf32>
    %61 = arith.maximumf %59, %60 : vector<128x8xf32>
    %62 = vector.shape_cast %61 : vector<128x8xf32> to vector<1x8x16x8xf32>
    %c0_68 = arith.constant 0 : index
    %c0_69 = arith.constant 0 : index
    %c0_70 = arith.constant 0 : index
    %c0_71 = arith.constant 0 : index
    %63 = vector.load %arg9[%c0_68, %c0_69, %c0_70, %c0_71] : memref<1x8x16x8xf32, #tpu.memory_space<vmem>>, vector<1x8x16x8xf32>
    tpu.vector_store %arg9[%c0_68, %c0_69, %c0_70, %c0_71], %62 {strides = array<i32>} : memref<1x8x16x8xf32, #tpu.memory_space<vmem>>, vector<1x8x16x8xf32>,
    return
  }
  func.func @transform_0(%arg0: i32, %arg1: i32) -> (i32, i32, i32, i32) {
    %c0_i32 = arith.constant 0 : i32
    %c0_i32_0 = arith.constant 0 : i32
    %c0_i32_1 = arith.constant 0 : i32
    return %arg0, %arg1, %c0_i32, %c0_i32_0 : i32, i32, i32, i32
  }
  func.func @transform_1(%arg0: i32, %arg1: i32) -> (i32, i32, i32, i32) {
    %c4_i32 = arith.constant 4 : i32
    %0 = arith.muli %arg1, %c4_i32 : i32
    %c1_i32 = arith.constant 1 : i32
    %1 = arith.subi %0, %c1_i32 : i32
    %c0_i32 = arith.constant 0 : i32
    %2 = arith.maxsi %1, %c0_i32 : i32
    %c0_i32_0 = arith.constant 0 : i32
    %c0_i32_1 = arith.constant 0 : i32
    %c0_i32_2 = arith.constant 0 : i32
    return %arg0, %2, %c0_i32_0, %c0_i32_1 : i32, i32, i32, i32
  }
  func.func @transform_2(%arg0: i32, %arg1: i32) -> (i32, i32, i32, i32) {
    %c1_i32 = arith.constant 1 : i32
    %0 = arith.addi %arg1, %c1_i32 : i32
    %c4_i32 = arith.constant 4 : i32
    %1 = arith.muli %0, %c4_i32 : i32
    %c7_i32 = arith.constant 7 : i32
    %2 = arith.minsi %1, %c7_i32 : i32
    %c0_i32 = arith.constant 0 : i32
    %c0_i32_0 = arith.constant 0 : i32
    %c0_i32_1 = arith.constant 0 : i32
    return %arg0, %2, %c0_i32, %c0_i32_0 : i32, i32, i32, i32
  }
  func.func @transform_3(%arg0: i32, %arg1: i32) -> (i32, i32) {
    %c0_i32 = arith.constant 0 : i32
    %c0_i32_0 = arith.constant 0 : i32
    %c0_i32_1 = arith.constant 0 : i32
    return %c0_i32, %c0_i32_0 : i32, i32
  }
  func.func @transform_4(%arg0: i32, %arg1: i32) -> (i32, i32) {
    %c0_i32 = arith.constant 0 : i32
    %c0_i32_0 = arith.constant 0 : i32
    %c0_i32_1 = arith.constant 0 : i32
    return %c0_i32, %c0_i32_0 : i32, i32
  }
  func.func @transform_5(%arg0: i32, %arg1: i32) -> (i32, i32) {
    %c0_i32 = arith.constant 0 : i32
    %c0_i32_0 = arith.constant 0 : i32
    %c0_i32_1 = arith.constant 0 : i32
    return %c0_i32, %c0_i32_0 : i32, i32
  }
  func.func @transform_6(%arg0: i32, %arg1: i32) -> (i32, i32) {
    %c0_i32 = arith.constant 0 : i32
    %c0_i32_0 = arith.constant 0 : i32
    %c0_i32_1 = arith.constant 0 : i32
    return %c0_i32, %c0_i32_0 : i32, i32
  }
  func.func @transform_7(%arg0: i32, %arg1: i32) -> (i32, i32, i32, i32) {
    %c0_i32 = arith.constant 0 : i32
    %c0_i32_0 = arith.constant 0 : i32
    %c0_i32_1 = arith.constant 0 : i32
    return %arg0, %arg1, %c0_i32, %c0_i32_0 : i32, i32, i32, i32
  }
}

</mosaic_0001>

<llo_original>
// kernel: double_conv_pallas.1
$region0: #{double_conv_pallas.1}
  #allocation0 [shape = 'u32[]', space=smem, size = 0x4, offset = 0x4, fixed_abs, tag = 'smem constant byte address 0x4 - core index']
  #allocation1 [shape = 'u32[144,128]{1,0:T(1,128)}', space=vmem, size = 0x12000, scoped, tag = 'internal scratch']
  #allocation2 [shape = 'f32[1,12,18,4]{3,2,1,0:T(8,128)}', space=vmem, size = 0x24000, scoped, tag = 'scratch operand']
  #allocation3 [shape = 'f32[1,10,18,8]{3,2,1,0:T(8,128)}', space=vmem, size = 0x1e000, scoped, tag = 'scratch operand']
  %s0 = inlined_call_operand.vmem [shape: f32[2,16,16,4], index: 0, kind: input, shape index: {}, may-alias: {0,1,2}]
  %s1 = inlined_call_operand.vmem [shape: f32[2,16,16,4], index: 1, kind: input, shape index: {}, may-alias: {0,1,2}]
  %s2 = inlined_call_operand.vmem [shape: f32[2,16,16,4], index: 2, kind: input, shape index: {}, may-alias: {0,1,2}]
  %s3 = inlined_call_operand.vmem [shape: f32[36,8], index: 3, kind: input, shape index: {}]
  %s4 = inlined_call_operand.vmem [shape: f32[1,8], index: 4, kind: input, shape index: {}]
  %s5 = inlined_call_operand.vmem [shape: f32[72,8], index: 5, kind: input, shape index: {}]
  %s6 = inlined_call_operand.vmem [shape: f32[1,8], index: 6, kind: input, shape index: {}]
  %s7 = inlined_call_operand.vmem [shape: f32[2,16,16,8], index: 7, kind: output, shape index: {}]
  %s8 = sld [smem:[#allocation0]]
  $region77: #{double_conv_pallas.1} parent=0
    _
  %s10 = ssub.s32 1, %s8
  %s11 = scalar_select 0, %s10, %s8
  loop: start=0, step=1, limit=6
  $region2: #{double_conv_pallas.1} parent=0 // loop_pre_header
    _
  $region3: #{double_conv_pallas.1} parent=0 // loop_header
    %s13 = sphi 0, %s17
    %p14 = scmp.ge.s32.totalorder %s13, 6
    %s20 = sphi 0, %s32
    %s21 = sphi 0, %s28
    %s22 = sphi 0, %s20
    %s23 = sphi 0, %s21
    %s24 = sphi 0, %s22
    %s25 = sphi 0, %s23
    %s37 = sphi 0, %s39
    %s40 = sphi 0, %s37
    %s41 = sphi 0, %s40
    %s57 = sphi 0, %s41
    %s73 = sphi 0, %s75
    %s76 = sphi 0, %s73
    %s77 = sphi 0, %s76
    %s93 = sphi 0, %s77
    %s109 = sphi 0, %s111
    %s112 = sphi 0, %s109
    %s113 = sphi 0, %s112
    %s129 = sphi 0, %s113
    %s133 = sphi 0, %s133
    %s135 = sphi 0, %s133
    %s136 = sphi 0, %s135
    %s150 = sphi 0, %s136
    %s154 = sphi 0, %s154
    %s156 = sphi 0, %s154
    %s157 = sphi 0, %s156
    %s171 = sphi 0, %s157
    %s175 = sphi 0, %s175
    %s177 = sphi 0, %s175
    %s178 = sphi 0, %s177
    %s192 = sphi 0, %s178
    %s196 = sphi 0, %s196
    %s198 = sphi 0, %s196
    %s199 = sphi 0, %s198
    %s213 = sphi 0, %s199
    %s221 = sphi 0, %s223
    %s224 = sphi 0, %s221
    %s225 = sphi 0, %s224
    %s241 = sphi 0, %s225
  $region4: #{double_conv_pallas.1} parent=0 // loop_header_branch
    %16 = sbr.rel (%p14) target = $region8
  $region5: #{double_conv_pallas.1} parent=0 // loop_body
    %s18 = ssub.s32 %s13, 1
    %s19 = ssub.s32 %s13, 2
    %s26 = sadd.s32 1, %s21
    %p27 = scmp.ge.s32.totalorder %s26, 2
    %s28 = scalar_select %p27, 0, %s26
    %s29 = sadd.s32 1, %s20
    %s30 = scalar_select %p27, %s29, %s20
    %p31 = scmp.ge.s32.totalorder %s30, 2
    %s32 = scalar_select %p31, 0, %s30
    %s33 = ssub.s32 %s20, %s32
    %s34 = ssub.s32 %s21, %s28
    %s35 = sor.u32 %s33, %s34
    %p36 = scmp.eq.s32.totalorder %s35, 0
    %s38 = sadd.s32 %s37, 1
    %s39 = scalar_select %p36, %s37, %s38
    %p42 = pneg %p36
    %p43 = scmp.eq.s32.totalorder %s13, 3
    %p44 = por %p42, %p43
    %p45 = scmp.ne.s32.totalorder %s37, %s40
    %p46 = scmp.eq.s32.totalorder %s13, 0
    %p47 = por %p45, %p46
    %p48 = scmp.ne.s32.totalorder %s37, %s40
    %p49 = scmp.eq.s32.totalorder %s18, 3
    %p50 = por %p48, %p49
    %p51 = scmp.ne.s32.totalorder %s40, %s41
    %p52 = scmp.eq.s32.totalorder %s18, 0
    %p53 = por %p51, %p52
    %p54 = scmp.ne.s32.totalorder %s40, %s41
    %p55 = scmp.eq.s32.totalorder %s19, 3
    %p56 = por %p54, %p55
    %p58 = scmp.ne.s32.totalorder %s41, %s57
    %p59 = scmp.eq.s32.totalorder %s19, 0
    %p60 = por %p58, %p59
    %s61 = smul.u32 %s21, 4
    %s62 = ssub.s32 %s61, 1
    %p63 = scmp.gt.s32.totalorder %s62, 0
    %s64 = scalar_select %p63, %s62, 0
    %s65 = smul.u32 %s28, 4
    %s66 = ssub.s32 %s65, 1
    %p67 = scmp.gt.s32.totalorder %s66, 0
    %s68 = scalar_select %p67, %s66, 0
    %s69 = ssub.s32 %s20, %s32
    %s70 = ssub.s32 %s64, %s68
    %s71 = sor.u32 %s69, %s70
    %p72 = scmp.eq.s32.totalorder %s71, 0
    %s74 = sadd.s32 %s73, 1
    %s75 = scalar_select %p72, %s73, %s74
    %p78 = pneg %p72
    %p79 = scmp.eq.s32.totalorder %s13, 3
    %p80 = por %p78, %p79
    %p81 = scmp.ne.s32.totalorder %s73, %s76
    %p82 = scmp.eq.s32.totalorder %s13, 0
    %p83 = por %p81, %p82
    %p84 = scmp.ne.s32.totalorder %s73, %s76
    %p85 = scmp.eq.s32.totalorder %s18, 3
    %p86 = por %p84, %p85
    %p87 = scmp.ne.s32.totalorder %s76, %s77
    %p88 = scmp.eq.s32.totalorder %s18, 0
    %p89 = por %p87, %p88
    %p90 = scmp.ne.s32.totalorder %s76, %s77
    %p91 = scmp.eq.s32.totalorder %s19, 3
    %p92 = por %p90, %p91
    %p94 = scmp.ne.s32.totalorder %s77, %s93
    %p95 = scmp.eq.s32.totalorder %s19, 0
    %p96 = por %p94, %p95
    %s97 = sadd.s32 %s21, 1
    %s98 = smul.u32 %s97, 4
    %p99 = scmp.lt.s32.totalorder %s98, 7
    %s100 = scalar_select %p99, %s98, 7
    %s101 = sadd.s32 %s28, 1
    %s102 = smul.u32 %s101, 4
    %p103 = scmp.lt.s32.totalorder %s102, 7
    %s104 = scalar_select %p103, %s102, 7
    %s105 = ssub.s32 %s20, %s32
    %s106 = ssub.s32 %s100, %s104
    %s107 = sor.u32 %s105, %s106
    %p108 = scmp.eq.s32.totalorder %s107, 0
    %s110 = sadd.s32 %s109, 1
    %s111 = scalar_select %p108, %s109, %s110
    %p114 = pneg %p108
    %p115 = scmp.eq.s32.totalorder %s13, 3
    %p116 = por %p114, %p115
    %p117 = scmp.ne.s32.totalorder %s109, %s112
    %p118 = scmp.eq.s32.totalorder %s13, 0
    %p119 = por %p117, %p118
    %p120 = scmp.ne.s32.totalorder %s109, %s112
    %p121 = scmp.eq.s32.totalorder %s18, 3
    %p122 = por %p120, %p121
    %p123 = scmp.ne.s32.totalorder %s112, %s113
    %p124 = scmp.eq.s32.totalorder %s18, 0
    %p125 = por %p123, %p124
    %p126 = scmp.ne.s32.totalorder %s112, %s113
    %p127 = scmp.eq.s32.totalorder %s19, 3
    %p128 = por %p126, %p127
    %p130 = scmp.ne.s32.totalorder %s113, %s129
    %p131 = scmp.eq.s32.totalorder %s19, 0
    %p132 = por %p130, %p131
    %s134 = sadd.s32 %s133, 1
    %p137 = scmp.eq.s32.totalorder %s13, 3
    %p138 = scmp.ne.s32.totalorder %s133, %s135
    %p139 = scmp.eq.s32.totalorder %s13, 0
    %p140 = por %p138, %p139
    %p141 = scmp.ne.s32.totalorder %s133, %s135
    %p142 = scmp.eq.s32.totalorder %s18, 3
    %p143 = por %p141, %p142
    %p144 = scmp.ne.s32.totalorder %s135, %s136
    %p145 = scmp.eq.s32.totalorder %s18, 0
    %p146 = por %p144, %p145
    %p147 = scmp.ne.s32.totalorder %s135, %s136
    %p148 = scmp.eq.s32.totalorder %s19, 3
    %p149 = por %p147, %p148
    %p151 = scmp.ne.s32.totalorder %s136, %s150
    %p152 = scmp.eq.s32.totalorder %s19, 0
    %p153 = por %p151, %p152
    %s155 = sadd.s32 %s154, 1
    %p158 = scmp.eq.s32.totalorder %s13, 3
    %p159 = scmp.ne.s32.totalorder %s154, %s156
    %p160 = scmp.eq.s32.totalorder %s13, 0
    %p161 = por %p159, %p160
    %p162 = scmp.ne.s32.totalorder %s154, %s156
    %p163 = scmp.eq.s32.totalorder %s18, 3
    %p164 = por %p162, %p163
    %p165 = scmp.ne.s32.totalorder %s156, %s157
    %p166 = scmp.eq.s32.totalorder %s18, 0
    %p167 = por %p165, %p166
    %p168 = scmp.ne.s32.totalorder %s156, %s157
    %p169 = scmp.eq.s32.totalorder %s19, 3
    %p170 = por %p168, %p169
    %p172 = scmp.ne.s32.totalorder %s157, %s171
    %p173 = scmp.eq.s32.totalorder %s19, 0
    %p174 = por %p172, %p173
    %s176 = sadd.s32 %s175, 1
    %p179 = scmp.eq.s32.totalorder %s13, 3
    %p180 = scmp.ne.s32.totalorder %s175, %s177
    %p181 = scmp.eq.s32.totalorder %s13, 0
    %p182 = por %p180, %p181
    %p183 = scmp.ne.s32.totalorder %s175, %s177
    %p184 = scmp.eq.s32.totalorder %s18, 3
    %p185 = por %p183, %p184
    %p186 = scmp.ne.s32.totalorder %s177, %s178
    %p187 = scmp.eq.s32.totalorder %s18, 0
    %p188 = por %p186, %p187
    %p189 = scmp.ne.s32.totalorder %s177, %s178
    %p190 = scmp.eq.s32.totalorder %s19, 3
    %p191 = por %p189, %p190
    %p193 = scmp.ne.s32.totalorder %s178, %s192
    %p194 = scmp.eq.s32.totalorder %s19, 0
    %p195 = por %p193, %p194
    %s197 = sadd.s32 %s196, 1
    %p200 = scmp.eq.s32.totalorder %s13, 3
    %p201 = scmp.ne.s32.totalorder %s196, %s198
    %p202 = scmp.eq.s32.totalorder %s13, 0
    %p203 = por %p201, %p202
    %p204 = scmp.ne.s32.totalorder %s196, %s198
    %p205 = scmp.eq.s32.totalorder %s18, 3
    %p206 = por %p204, %p205
    %p207 = scmp.ne.s32.totalorder %s198, %s199
    %p208 = scmp.eq.s32.totalorder %s18, 0
    %p209 = por %p207, %p208
    %p210 = scmp.ne.s32.totalorder %s198, %s199
    %p211 = scmp.eq.s32.totalorder %s19, 3
    %p212 = por %p210, %p211
    %p214 = scmp.ne.s32.totalorder %s199, %s213
    %p215 = scmp.eq.s32.totalorder %s19, 0
    %p216 = por %p214, %p215
    %s217 = ssub.s32 %s20, %s32
    %s218 = ssub.s32 %s21, %s28
    %s219 = sor.u32 %s217, %s218
    %p220 = scmp.eq.s32.totalorder %s219, 0
    %s222 = sadd.s32 %s221, 1
    %s223 = scalar_select %p220, %s221, %s222
    %p226 = pneg %p220
    %p227 = scmp.eq.s32.totalorder %s13, 3
    %p228 = por %p226, %p227
    %p229 = scmp.ne.s32.totalorder %s221, %s224
    %p230 = scmp.eq.s32.totalorder %s13, 0
    %p231 = por %p229, %p230
    %p232 = scmp.ne.s32.totalorder %s221, %s224
    %p233 = scmp.eq.s32.totalorder %s18, 3
    %p234 = por %p232, %p233
    %p235 = scmp.ne.s32.totalorder %s224, %s225
    %p236 = scmp.eq.s32.totalorder %s18, 0
    %p237 = por %p235, %p236
    %p238 = scmp.ne.s32.totalorder %s224, %s225
    %p239 = scmp.eq.s32.totalorder %s19, 3
    %p240 = por %p238, %p239
    %p242 = scmp.ne.s32.totalorder %s225, %s241
    %p243 = scmp.eq.s32.totalorder %s19, 0
    %p244 = por %p242, %p243
    %p245 = scmp.le.s32.totalorder 1, %s13
    %p246 = scmp.lt.s32.totalorder %s13, 5
    %p247 = pnand %p245, %p246
    %p248 = pneg %p247
    // Predicated region
    $region9: #{double_conv_pallas.1} parent=5 // pred_check
      _
    $region10: #{double_conv_pallas.1} parent=5 // pred_check_branch
      %250 = sbr.rel (%p247) target = $region12
    $region11: #{double_conv_pallas.1} parent=5 // pred_region
      %s251 = ssub.s32 %s13, 1
      // Predicated region
      $region13: #{double_conv_pallas.1} parent=11 // pred_check
        %p252 = pneg %p146
      $region14: #{double_conv_pallas.1} parent=11 // pred_check_branch
        %254 = sbr.rel (%p252) target = $region16
      $region15: #{double_conv_pallas.1} parent=11 // pred_region
        _
      $region16: #{double_conv_pallas.1} parent=11 // pred_fallthru
        _
      // Predicated region
      $region17: #{double_conv_pallas.1} parent=11 // pred_check
        %p255 = pneg %p167
      $region18: #{double_conv_pallas.1} parent=11 // pred_check_branch
        %257 = sbr.rel (%p255) target = $region20
      $region19: #{double_conv_pallas.1} parent=11 // pred_region
        _
      $region20: #{double_conv_pallas.1} parent=11 // pred_fallthru
        _
      // Predicated region
      $region21: #{double_conv_pallas.1} parent=11 // pred_check
        %p258 = pneg %p188
      $region22: #{double_conv_pallas.1} parent=11 // pred_check_branch
        %260 = sbr.rel (%p258) target = $region24
      $region23: #{double_conv_pallas.1} parent=11 // pred_region
        _
      $region24: #{double_conv_pallas.1} parent=11 // pred_fallthru
        _
      // Predicated region
      $region25: #{double_conv_pallas.1} parent=11 // pred_check
        %p261 = pneg %p209
      $region26: #{double_conv_pallas.1} parent=11 // pred_check_branch
        %263 = sbr.rel (%p261) target = $region28
      $region27: #{double_conv_pallas.1} parent=11 // pred_region
        _
      $region28: #{double_conv_pallas.1} parent=11 // pred_fallthru
        _
    $region12: #{double_conv_pallas.1} parent=5 // pred_fallthru
      _
    %p264 = scmp.lt.s32.totalorder %s13, 4
    // Predicated region
    $region29: #{double_conv_pallas.1} parent=5 // pred_check
      %p265 = pneg %p264
    $region30: #{double_conv_pallas.1} parent=5 // pred_check_branch
      %267 = sbr.rel (%p265) target = $region32
    $region31: #{double_conv_pallas.1} parent=5 // pred_region
      // Predicated region
      $region33: #{double_conv_pallas.1} parent=31 // pred_check
        %p268 = pneg %p47
      $region34: #{double_conv_pallas.1} parent=31 // pred_check_branch
        %270 = sbr.rel (%p268) target = $region36
      $region35: #{double_conv_pallas.1} parent=31 // pred_region
        %s271 = smul.u32 8, %s21
        %p272 = scmp.lt.s32.totalorder %s20, 1
        %s273 = scalar_select %p272, %s20, 1
        %p274 = scmp.lt.s32.totalorder %s271, 15
        %s275 = scalar_select %p274, %s271, 15
        %s276 = smul.addr %s275, 2
        %s277 = smul.addr %s273, 32
        %s278 = sadd.s32 %s276, %s277
        %s279 = smul.addr %s278, 8
        %s280 = scalar_lea.vmem %s0, %s279
        %s281 = smul.u32 8, %s21
      $region36: #{double_conv_pallas.1} parent=31 // pred_fallthru
        _
      // Predicated region
      $region37: #{double_conv_pallas.1} parent=31 // pred_check
        %p282 = pneg %p83
      $region38: #{double_conv_pallas.1} parent=31 // pred_check_branch
        %284 = sbr.rel (%p282) target = $region40
      $region39: #{double_conv_pallas.1} parent=31 // pred_region
        %s285 = smul.u32 %s21, 4
        %s286 = ssub.s32 %s285, 1
        %p287 = scmp.gt.s32.totalorder %s286, 0
        %s288 = scalar_select %p287, %s286, 0
        %s289 = smul.u32 2, %s288
        %p290 = scmp.lt.s32.totalorder %s20, 1
        %s291 = scalar_select %p290, %s20, 1
        %p292 = scmp.lt.s32.totalorder %s289, 15
        %s293 = scalar_select %p292, %s289, 15
        %s294 = smul.addr %s293, 2
        %s295 = smul.addr %s291, 32
        %s296 = sadd.s32 %s294, %s295
        %s297 = smul.addr %s296, 8
        %s298 = scalar_lea.vmem %s1, %s297
        %s299 = smul.u32 %s21, 4
        %s300 = ssub.s32 %s299, 1
        %p301 = scmp.gt.s32.totalorder %s300, 0
        %s302 = scalar_select %p301, %s300, 0
        %s303 = smul.u32 2, %s302
      $region40: #{double_conv_pallas.1} parent=31 // pred_fallthru
        _
      // Predicated region
      $region41: #{double_conv_pallas.1} parent=31 // pred_check
        %p304 = pneg %p119
      $region42: #{double_conv_pallas.1} parent=31 // pred_check_branch
        %306 = sbr.rel (%p304) target = $region44
      $region43: #{double_conv_pallas.1} parent=31 // pred_region
        %s307 = sadd.s32 %s21, 1
        %s308 = smul.u32 %s307, 4
        %p309 = scmp.lt.s32.totalorder %s308, 7
        %s310 = scalar_select %p309, %s308, 7
        %s311 = smul.u32 2, %s310
        %p312 = scmp.lt.s32.totalorder %s20, 1
        %s313 = scalar_select %p312, %s20, 1
        %p314 = scmp.lt.s32.totalorder %s311, 15
        %s315 = scalar_select %p314, %s311, 15
        %s316 = smul.addr %s315, 2
        %s317 = smul.addr %s313, 32
        %s318 = sadd.s32 %s316, %s317
        %s319 = smul.addr %s318, 8
        %s320 = scalar_lea.vmem %s2, %s319
        %s321 = sadd.s32 %s21, 1
        %s322 = smul.u32 %s321, 4
        %p323 = scmp.lt.s32.totalorder %s322, 7
        %s324 = scalar_select %p323, %s322, 7
        %s325 = smul.u32 2, %s324
      $region44: #{double_conv_pallas.1} parent=31 // pred_fallthru
        _
    $region32: #{double_conv_pallas.1} parent=5 // pred_fallthru
      _
    %p326 = scmp.le.s32.totalorder 1, %s13
    %p327 = scmp.lt.s32.totalorder %s13, 5
    %p328 = pnand %p326, %p327
    %p329 = pneg %p328
    // Predicated region
    $region45: #{double_conv_pallas.1} parent=5 // pred_check
      _
    $region46: #{double_conv_pallas.1} parent=5 // pred_check_branch
      %331 = sbr.rel (%p328) target = $region48
    $region47: #{double_conv_pallas.1} parent=5 // pred_region
      %s332 = ssub.s32 %s13, 1
      %s333 = smul.u32 8, %s23
      %p334 = scmp.lt.s32.totalorder %s22, 1
      %s335 = scalar_select %p334, %s22, 1
      %p336 = scmp.lt.s32.totalorder %s333, 15
      %s337 = scalar_select %p336, %s333, 15
      %s338 = smul.addr %s337, 2
      %s339 = smul.addr %s335, 32
      %s340 = sadd.s32 %s338, %s339
      %s341 = smul.addr %s340, 8
      %s342 = scalar_lea.vmem %s0, %s341
      %p343 = pneg %p53
      %p344 = pneg %p50
      %s345 = smul.u32 %s23, 4
      %s346 = ssub.s32 %s345, 1
      %p347 = scmp.gt.s32.totalorder %s346, 0
      %s348 = scalar_select %p347, %s346, 0
      %s349 = smul.u32 2, %s348
      %p350 = scmp.lt.s32.totalorder %s22, 1
      %s351 = scalar_select %p350, %s22, 1
      %p352 = scmp.lt.s32.totalorder %s349, 15
      %s353 = scalar_select %p352, %s349, 15
      %s354 = smul.addr %s353, 2
      %s355 = smul.addr %s351, 32
      %s356 = sadd.s32 %s354, %s355
      %s357 = smul.addr %s356, 8
      %s358 = scalar_lea.vmem %s1, %s357
      %p359 = pneg %p89
      %p360 = pneg %p86
      %s361 = sadd.s32 %s23, 1
      %s362 = smul.u32 %s361, 4
      %p363 = scmp.lt.s32.totalorder %s362, 7
      %s364 = scalar_select %p363, %s362, 7
      %s365 = smul.u32 2, %s364
      %p366 = scmp.lt.s32.totalorder %s22, 1
      %s367 = scalar_select %p366, %s22, 1
      %p368 = scmp.lt.s32.totalorder %s365, 15
      %s369 = scalar_select %p368, %s365, 15
      %s370 = smul.addr %s369, 2
      %s371 = smul.addr %s367, 32
      %s372 = sadd.s32 %s370, %s371
      %s373 = smul.addr %s372, 8
      %s374 = scalar_lea.vmem %s2, %s373
      %p375 = pneg %p125
      %p376 = pneg %p122
      %p377 = pneg %p146
      %p378 = pneg %p143
      %p379 = pneg %p167
      %p380 = pneg %p164
      %p381 = pneg %p188
      %p382 = pneg %p185
      %p383 = pneg %p209
      %p384 = pneg %p206
      %p385 = pneg %p237
      %p386 = pneg %p234
      %s387 = smul.u32 8, %s23
      %p388 = scmp.lt.s32.totalorder %s22, 1
      %s389 = scalar_select %p388, %s22, 1
      %p390 = scmp.lt.s32.totalorder %s387, 15
      %s391 = scalar_select %p390, %s387, 15
      %s392 = smul.addr %s391, 2
      %s393 = smul.addr %s389, 32
      %s394 = sadd.s32 %s392, %s393
      %s395 = smul.addr %s394, 8
      %s396 = scalar_lea.vmem %s7, %s395
      %s397 = smul.u32 8, %s23
      %p398 = scmp.lt.s32.totalorder %s22, 1
      %s399 = scalar_select %p398, %s22, 1
      %p400 = scmp.lt.s32.totalorder %s397, 15
      %s401 = scalar_select %p400, %s397, 15
      %s402 = smul.addr %s401, 2
      %s403 = smul.addr %s399, 32
      %s404 = sadd.s32 %s402, %s403
      %s405 = smul.addr %s404, 8
      %s406 = scalar_lea.vmem %s0, %s405
      %s407 = smul.u32 8, %s23
      %s408 = smul.u32 %s23, 4
      %s409 = ssub.s32 %s408, 1
      %p410 = scmp.gt.s32.totalorder %s409, 0
      %s411 = scalar_select %p410, %s409, 0
      %s412 = smul.u32 2, %s411
      %p413 = scmp.lt.s32.totalorder %s22, 1
      %s414 = scalar_select %p413, %s22, 1
      %p415 = scmp.lt.s32.totalorder %s412, 15
      %s416 = scalar_select %p415, %s412, 15
      %s417 = smul.addr %s416, 2
      %s418 = smul.addr %s414, 32
      %s419 = sadd.s32 %s417, %s418
      %s420 = smul.addr %s419, 8
      %s421 = scalar_lea.vmem %s1, %s420
      %s422 = smul.u32 %s23, 4
      %s423 = ssub.s32 %s422, 1
      %p424 = scmp.gt.s32.totalorder %s423, 0
      %s425 = scalar_select %p424, %s423, 0
      %s426 = smul.u32 2, %s425
      %s427 = sadd.s32 %s23, 1
      %s428 = smul.u32 %s427, 4
      %p429 = scmp.lt.s32.totalorder %s428, 7
      %s430 = scalar_select %p429, %s428, 7
      %s431 = smul.u32 2, %s430
      %p432 = scmp.lt.s32.totalorder %s22, 1
      %s433 = scalar_select %p432, %s22, 1
      %p434 = scmp.lt.s32.totalorder %s431, 15
      %s435 = scalar_select %p434, %s431, 15
      %s436 = smul.addr %s435, 2
      %s437 = smul.addr %s433, 32
      %s438 = sadd.s32 %s436, %s437
      %s439 = smul.addr %s438, 8
      %s440 = scalar_lea.vmem %s2, %s439
      %s441 = sadd.s32 %s23, 1
      %s442 = smul.u32 %s441, 4
      %p443 = scmp.lt.s32.totalorder %s442, 7
      %s444 = scalar_select %p443, %s442, 7
      %s445 = smul.u32 2, %s444
      %s446 = smul.u32 8, %s23
      %p447 = scmp.lt.s32.totalorder %s22, 1
      %s448 = scalar_select %p447, %s22, 1
      %p449 = scmp.lt.s32.totalorder %s446, 15
      %s450 = scalar_select %p449, %s446, 15
      %s451 = smul.addr %s450, 2
      %s452 = smul.addr %s448, 32
      %s453 = sadd.s32 %s451, %s452
      %s454 = smul.addr %s453, 8
      %s455 = scalar_lea.vmem %s7, %s454
      %s456 = smul.u32 8, %s23
      %vm457 = vcmask 24576
      %458 = vst.msk [vmem:[#allocation2] sm:$0x1] %vm457, 0.0
      %459 = vst.msk [vmem:[#allocation2 + $0x18] sm:$0x1] %vm457, 0.0
      %460 = vst.msk [vmem:[#allocation2 + $0x30] sm:$0x1] %vm457, 0.0
      %461 = vst.msk [vmem:[#allocation2 + $0x48] sm:$0x1] %vm457, 0.0
      %462 = vst.msk [vmem:[#allocation2 + $0x60] sm:$0x1] %vm457, 0.0
      %463 = vst.msk [vmem:[#allocation2 + $0x78] sm:$0x1] %vm457, 0.0
      %464 = vst.msk [vmem:[#allocation2 + $0x90] sm:$0x1] %vm457, 0.0
      %465 = vst.msk [vmem:[#allocation2 + $0xa8] sm:$0x1] %vm457, 0.0
      %466 = vst.msk [vmem:[#allocation2 + $0xc0] sm:$0x1] %vm457, 0.0
      %467 = vst.msk [vmem:[#allocation2 + $0xd8] sm:$0x1] %vm457, 0.0
      %468 = vst.msk [vmem:[#allocation2 + $0xf0] sm:$0x1] %vm457, 0.0
      %469 = vst.msk [vmem:[#allocation2 + $0x108] sm:$0x1] %vm457, 0.0
      %470 = vst.msk [vmem:[#allocation2 + $0x11] sm:$0x1] %vm457, 0.0
      %471 = vst.msk [vmem:[#allocation2 + $0x29] sm:$0x1] %vm457, 0.0
      %472 = vst.msk [vmem:[#allocation2 + $0x41] sm:$0x1] %vm457, 0.0
      %473 = vst.msk [vmem:[#allocation2 + $0x59] sm:$0x1] %vm457, 0.0
      %474 = vst.msk [vmem:[#allocation2 + $0x71] sm:$0x1] %vm457, 0.0
      %475 = vst.msk [vmem:[#allocation2 + $0x89] sm:$0x1] %vm457, 0.0
      %476 = vst.msk [vmem:[#allocation2 + $0xa1] sm:$0x1] %vm457, 0.0
      %477 = vst.msk [vmem:[#allocation2 + $0xb9] sm:$0x1] %vm457, 0.0
      %478 = vst.msk [vmem:[#allocation2 + $0xd1] sm:$0x1] %vm457, 0.0
      %479 = vst.msk [vmem:[#allocation2 + $0xe9] sm:$0x1] %vm457, 0.0
      %480 = vst.msk [vmem:[#allocation2 + $0x101] sm:$0x1] %vm457, 0.0
      %481 = vst.msk [vmem:[#allocation2 + $0x119] sm:$0x1] %vm457, 0.0
      %v482 = vld [vmem:[%s406] sm:$0xff]
      %v483 = vld [vmem:[%s406 + $0x8] sm:$0xff]
      %v484 = vld [vmem:[%s406 + $0x10] sm:$0xff]
      %v485 = vld [vmem:[%s406 + $0x18] sm:$0xff]
      %v486 = vld [vmem:[%s406 + $0x20] sm:$0xff]
      %v487 = vld [vmem:[%s406 + $0x28] sm:$0xff]
      %v488 = vld [vmem:[%s406 + $0x30] sm:$0xff]
      %v489 = vld [vmem:[%s406 + $0x38] sm:$0xff]
      %v490 = vld [vmem:[%s406 + $0x40] sm:$0xff]
      %v491 = vld [vmem:[%s406 + $0x48] sm:$0xff]
      %v492 = vld [vmem:[%s406 + $0x50] sm:$0xff]
      %v493 = vld [vmem:[%s406 + $0x58] sm:$0xff]
      %v494 = vld [vmem:[%s406 + $0x60] sm:$0xff]
      %v495 = vld [vmem:[%s406 + $0x68] sm:$0xff]
      %v496 = vld [vmem:[%s406 + $0x70] sm:$0xff]
      %v497 = vld [vmem:[%s406 + $0x78] sm:$0xff]
      %s498 = scalar_lea.vmem [#allocation2], 48
      %vm499 = vcmask 31744
      %500 = vst.msk [vmem:[%s498 + $0x1] sm:$0xff] %vm499, %v482
      %501 = vst.msk [vmem:[%s498 + $0x9] sm:$0xff] %vm499, %v483
      %502 = vst.msk [vmem:[%s498 + $0x19] sm:$0xff] %vm499, %v484
      %503 = vst.msk [vmem:[%s498 + $0x21] sm:$0xff] %vm499, %v485
      %504 = vst.msk [vmem:[%s498 + $0x31] sm:$0xff] %vm499, %v486
      %505 = vst.msk [vmem:[%s498 + $0x39] sm:$0xff] %vm499, %v487
      %506 = vst.msk [vmem:[%s498 + $0x49] sm:$0xff] %vm499, %v488
      %507 = vst.msk [vmem:[%s498 + $0x51] sm:$0xff] %vm499, %v489
      %508 = vst.msk [vmem:[%s498 + $0x61] sm:$0xff] %vm499, %v490
      %509 = vst.msk [vmem:[%s498 + $0x69] sm:$0xff] %vm499, %v491
      %510 = vst.msk [vmem:[%s498 + $0x79] sm:$0xff] %vm499, %v492
      %511 = vst.msk [vmem:[%s498 + $0x81] sm:$0xff] %vm499, %v493
      %512 = vst.msk [vmem:[%s498 + $0x91] sm:$0xff] %vm499, %v494
      %513 = vst.msk [vmem:[%s498 + $0x99] sm:$0xff] %vm499, %v495
      %514 = vst.msk [vmem:[%s498 + $0xa9] sm:$0xff] %vm499, %v496
      %515 = vst.msk [vmem:[%s498 + $0xb1] sm:$0xff] %vm499, %v497
      %v516 = vld [vmem:[%s421] sm:$0xff]
      %v517 = vld [vmem:[%s421 + $0x8] sm:$0xff]
      %v518 = vld [vmem:[%s421 + $0x10] sm:$0xff]
      %v519 = vld [vmem:[%s421 + $0x18] sm:$0xff]
      %520 = vst.msk [vmem:[#allocation2 + $0x1] sm:$0xff] %vm499, %v516
      %521 = vst.msk [vmem:[#allocation2 + $0x9] sm:$0xff] %vm499, %v517
      %522 = vst.msk [vmem:[#allocation2 + $0x19] sm:$0xff] %vm499, %v518
      %523 = vst.msk [vmem:[#allocation2 + $0x21] sm:$0xff] %vm499, %v519
      %v524 = vld [vmem:[%s440] sm:$0xff]
      %v525 = vld [vmem:[%s440 + $0x8] sm:$0xff]
      %v526 = vld [vmem:[%s440 + $0x10] sm:$0xff]
      %v527 = vld [vmem:[%s440 + $0x18] sm:$0xff]
      %s528 = scalar_lea.vmem [#allocation2], 240
      %529 = vst.msk [vmem:[%s528 + $0x1] sm:$0xff] %vm499, %v524
      %530 = vst.msk [vmem:[%s528 + $0x9] sm:$0xff] %vm499, %v525
      %531 = vst.msk [vmem:[%s528 + $0x19] sm:$0xff] %vm499, %v526
      %532 = vst.msk [vmem:[%s528 + $0x21] sm:$0xff] %vm499, %v527
      %p533 = scmp.eq.s32.totalorder %s23, 0
      // Predicated region
      $region49: #{double_conv_pallas.1} parent=47 // pred_check
        %p534 = pneg %p533
      $region50: #{double_conv_pallas.1} parent=47 // pred_check_branch
        %536 = sbr.rel (%p534) target = $region52
      $region51: #{double_conv_pallas.1} parent=47 // pred_region
        %537 = vst.msk [vmem:[#allocation2 + $0x1] sm:$0xff] %vm499, 0.0
        %538 = vst.msk [vmem:[#allocation2 + $0x9] sm:$0xff] %vm499, 0.0
        %539 = vst.msk [vmem:[#allocation2 + $0x19] sm:$0xff] %vm499, 0.0
        %540 = vst.msk [vmem:[#allocation2 + $0x21] sm:$0xff] %vm499, 0.0
      $region52: #{double_conv_pallas.1} parent=47 // pred_fallthru
        _
      %p541 = scmp.eq.s32.totalorder %s23, 1
      // Predicated region
      $region53: #{double_conv_pallas.1} parent=47 // pred_check
        %p542 = pneg %p541
      $region54: #{double_conv_pallas.1} parent=47 // pred_check_branch
        %544 = sbr.rel (%p542) target = $region56
      $region55: #{double_conv_pallas.1} parent=47 // pred_region
        %545 = vst.msk [vmem:[%s528 + $0x1] sm:$0xff] %vm499, 0.0
        %546 = vst.msk [vmem:[%s528 + $0x9] sm:$0xff] %vm499, 0.0
        %547 = vst.msk [vmem:[%s528 + $0x19] sm:$0xff] %vm499, 0.0
        %548 = vst.msk [vmem:[%s528 + $0x21] sm:$0xff] %vm499, 0.0
      $region56: #{double_conv_pallas.1} parent=47 // pred_fallthru
        _
      %v549 = vld [vmem:[#allocation2] sm:$0xff]
      %v550 = vld [vmem:[#allocation2 + $0x8] sm:$0xff]
      %v551 = vld [vmem:[#allocation2 + $0x10] sm:$0x3]
      %v552 = vld [vmem:[#allocation2 + $0x18] sm:$0xff]
      %v553 = vld [vmem:[#allocation2 + $0x20] sm:$0xff]
      %v554 = vld [vmem:[#allocation2 + $0x28] sm:$0x3]
      %v555 = vld [vmem:[#allocation2 + $0x30] sm:$0xff]
      %v556 = vld [vmem:[#allocation2 + $0x38] sm:$0xff]
      %v557 = vld [vmem:[#allocation2 + $0x40] sm:$0x3]
      %v558 = vld [vmem:[#allocation2 + $0x48] sm:$0xff]
      %v559 = vld [vmem:[#allocation2 + $0x50] sm:$0xff]
      %v560 = vld [vmem:[#allocation2 + $0x58] sm:$0x3]
      %v561 = vld [vmem:[#allocation2 + $0x60] sm:$0xff]
      %v562 = vld [vmem:[#allocation2 + $0x68] sm:$0xff]
      %v563 = vld [vmem:[#allocation2 + $0x70] sm:$0x3]
      %v564 = vld [vmem:[#allocation2 + $0x78] sm:$0xff]
      %v565 = vld [vmem:[#allocation2 + $0x80] sm:$0xff]
      %v566 = vld [vmem:[#allocation2 + $0x88] sm:$0x3]
      %v567 = vld [vmem:[#allocation2 + $0x90] sm:$0xff]
      %v568 = vld [vmem:[#allocation2 + $0x98] sm:$0xff]
      %v569 = vld [vmem:[#allocation2 + $0xa0] sm:$0x3]
      %v570 = vld [vmem:[#allocation2 + $0xa8] sm:$0xff]
      %v571 = vld [vmem:[#allocation2 + $0xb0] sm:$0xff]
      %v572 = vld [vmem:[#allocation2 + $0xb8] sm:$0x3]
      %v573 = vld [vmem:[#allocation2 + $0xc0] sm:$0xff]
      %v574 = vld [vmem:[#allocation2 + $0xc8] sm:$0xff]
      %v575 = vld [vmem:[#allocation2 + $0xd0] sm:$0x3]
      %v576 = vld [vmem:[#allocation2 + $0xd8] sm:$0xff]
      %v577 = vld [vmem:[#allocation2 + $0xe0] sm:$0xff]
      %v578 = vld [vmem:[#allocation2 + $0xe8] sm:$0x3]
      %v579 = vld [vmem:[#allocation2 + $0xf0] sm:$0xff]
      %v580 = vld [vmem:[#allocation2 + $0xf8] sm:$0xff]
      %v581 = vld [vmem:[#allocation2 + $0x100] sm:$0x3]
      %v582 = vld [vmem:[#allocation2 + $0x108] sm:$0xff]
      %v583 = vld [vmem:[#allocation2 + $0x110] sm:$0xff]
      %v584 = vld [vmem:[#allocation2 + $0x118] sm:$0x3]
      %vm621 = vcmask 1046528
      %v622 = vrot.slane %v549, 1
      %v623 = vrot.slane %v550, 1
      %v624 = vsel %vm621, %v622, %v623
      %v625 = vrot.slane %v551, 1
      %v626 = vsel %vm621, %v623, %v625
      %v627 = vrot.slane %v552, 1
      %v628 = vrot.slane %v553, 1
      %v629 = vsel %vm621, %v627, %v628
      %v630 = vrot.slane %v554, 1
      %v631 = vsel %vm621, %v628, %v630
      %v632 = vrot.slane %v555, 1
      %v633 = vrot.slane %v556, 1
      %v634 = vsel %vm621, %v632, %v633
      %v635 = vrot.slane %v557, 1
      %v636 = vsel %vm621, %v633, %v635
      %v637 = vrot.slane %v558, 1
      %v638 = vrot.slane %v559, 1
      %v639 = vsel %vm621, %v637, %v638
      %v640 = vrot.slane %v560, 1
      %v641 = vsel %vm621, %v638, %v640
      %v642 = vrot.slane %v561, 1
      %v643 = vrot.slane %v562, 1
      %v644 = vsel %vm621, %v642, %v643
      %v645 = vrot.slane %v563, 1
      %v646 = vsel %vm621, %v643, %v645
      %v647 = vrot.slane %v564, 1
      %v648 = vrot.slane %v565, 1
      %v649 = vsel %vm621, %v647, %v648
      %v650 = vrot.slane %v566, 1
      %v651 = vsel %vm621, %v648, %v650
      %v652 = vrot.slane %v567, 1
      %v653 = vrot.slane %v568, 1
      %v654 = vsel %vm621, %v652, %v653
      %v655 = vrot.slane %v569, 1
      %v656 = vsel %vm621, %v653, %v655
      %v657 = vrot.slane %v570, 1
      %v658 = vrot.slane %v571, 1
      %v659 = vsel %vm621, %v657, %v658
      %v660 = vrot.slane %v572, 1
      %v661 = vsel %vm621, %v658, %v660
      %v662 = vrot.slane %v573, 1
      %v663 = vrot.slane %v574, 1
      %v664 = vsel %vm621, %v662, %v663
      %v665 = vrot.slane %v575, 1
      %v666 = vsel %vm621, %v663, %v665
      %v667 = vrot.slane %v576, 1
      %v668 = vrot.slane %v577, 1
      %v669 = vsel %vm621, %v667, %v668
      %v670 = vrot.slane %v578, 1
      %v671 = vsel %vm621, %v668, %v670
      %v672 = vrot.slane %v579, 1
      %v673 = vrot.slane %v580, 1
      %v674 = vsel %vm621, %v672, %v673
      %v675 = vrot.slane %v581, 1
      %v676 = vsel %vm621, %v673, %v675
      %v677 = vrot.slane %v582, 1
      %v678 = vrot.slane %v583, 1
      %v679 = vsel %vm621, %v677, %v678
      %v680 = vrot.slane %v584, 1
      %v681 = vsel %vm621, %v678, %v680
      %682 = vrot.lane.b32.xlu0 %v624, 4
      %v683 = vpop.permute.xlu0 %682
      %684 = vrot.lane.b32.xlu0 %v626, 4
      %v685 = vpop.permute.xlu0 %684
      %686 = vrot.lane.b32.xlu0 %v629, 4
      %v687 = vpop.permute.xlu0 %686
      %688 = vrot.lane.b32.xlu0 %v631, 4
      %v689 = vpop.permute.xlu0 %688
      %690 = vrot.lane.b32.xlu0 %v634, 4
      %v691 = vpop.permute.xlu0 %690
      %692 = vrot.lane.b32.xlu0 %v636, 4
      %v693 = vpop.permute.xlu0 %692
      %694 = vrot.lane.b32.xlu0 %v639, 4
      %v695 = vpop.permute.xlu0 %694
      %696 = vrot.lane.b32.xlu0 %v641, 4
      %v697 = vpop.permute.xlu0 %696
      %698 = vrot.lane.b32.xlu0 %v644, 4
      %v699 = vpop.permute.xlu0 %698
      %700 = vrot.lane.b32.xlu0 %v646, 4
      %v701 = vpop.permute.xlu0 %700
      %702 = vrot.lane.b32.xlu0 %v649, 4
      %v703 = vpop.permute.xlu0 %702
      %704 = vrot.lane.b32.xlu0 %v651, 4
      %v705 = vpop.permute.xlu0 %704
      %706 = vrot.lane.b32.xlu0 %v654, 4
      %v707 = vpop.permute.xlu0 %706
      %708 = vrot.lane.b32.xlu0 %v656, 4
      %v709 = vpop.permute.xlu0 %708
      %710 = vrot.lane.b32.xlu0 %v659, 4
      %v711 = vpop.permute.xlu0 %710
      %712 = vrot.lane.b32.xlu0 %v661, 4
      %v713 = vpop.permute.xlu0 %712
      %714 = vrot.lane.b32.xlu0 %v664, 4
      %v715 = vpop.permute.xlu0 %714
      %716 = vrot.lane.b32.xlu0 %v666, 4
      %v717 = vpop.permute.xlu0 %716
      %718 = vrot.lane.b32.xlu0 %v669, 4
      %v719 = vpop.permute.xlu0 %718
      %720 = vrot.lane.b32.xlu0 %v671, 4
      %v721 = vpop.permute.xlu0 %720
      %722 = vrot.lane.b32.xlu0 %v674, 4
      %v723 = vpop.permute.xlu0 %722
      %724 = vrot.lane.b32.xlu0 %v676, 4
      %v725 = vpop.permute.xlu0 %724
      %726 = vrot.lane.b32.xlu0 %v679, 4
      %v727 = vpop.permute.xlu0 %726
      %728 = vrot.lane.b32.xlu0 %v681, 4
      %v729 = vpop.permute.xlu0 %728
      %vm754 = vcmask 1045504
      %v755 = vrot.slane %v549, 2
      %v756 = vrot.slane %v550, 2
      %v757 = vsel %vm754, %v755, %v756
      %v758 = vrot.slane %v551, 2
      %v759 = vsel %vm754, %v756, %v758
      %v760 = vrot.slane %v552, 2
      %v761 = vrot.slane %v553, 2
      %v762 = vsel %vm754, %v760, %v761
      %v763 = vrot.slane %v554, 2
      %v764 = vsel %vm754, %v761, %v763
      %v765 = vrot.slane %v555, 2
      %v766 = vrot.slane %v556, 2
      %v767 = vsel %vm754, %v765, %v766
      %v768 = vrot.slane %v557, 2
      %v769 = vsel %vm754, %v766, %v768
      %v770 = vrot.slane %v558, 2
      %v771 = vrot.slane %v559, 2
      %v772 = vsel %vm754, %v770, %v771
      %v773 = vrot.slane %v560, 2
      %v774 = vsel %vm754, %v771, %v773
      %v775 = vrot.slane %v561, 2
      %v776 = vrot.slane %v562, 2
      %v777 = vsel %vm754, %v775, %v776
      %v778 = vrot.slane %v563, 2
      %v779 = vsel %vm754, %v776, %v778
      %v780 = vrot.slane %v564, 2
      %v781 = vrot.slane %v565, 2
      %v782 = vsel %vm754, %v780, %v781
      %v783 = vrot.slane %v566, 2
      %v784 = vsel %vm754, %v781, %v783
      %v785 = vrot.slane %v567, 2
      %v786 = vrot.slane %v568, 2
      %v787 = vsel %vm754, %v785, %v786
      %v788 = vrot.slane %v569, 2
      %v789 = vsel %vm754, %v786, %v788
      %v790 = vrot.slane %v570, 2
      %v791 = vrot.slane %v571, 2
      %v792 = vsel %vm754, %v790, %v791
      %v793 = vrot.slane %v572, 2
      %v794 = vsel %vm754, %v791, %v793
      %v795 = vrot.slane %v573, 2
      %v796 = vrot.slane %v574, 2
      %v797 = vsel %vm754, %v795, %v796
      %v798 = vrot.slane %v575, 2
      %v799 = vsel %vm754, %v796, %v798
      %v800 = vrot.slane %v576, 2
      %v801 = vrot.slane %v577, 2
      %v802 = vsel %vm754, %v800, %v801
      %v803 = vrot.slane %v578, 2
      %v804 = vsel %vm754, %v801, %v803
      %v805 = vrot.slane %v579, 2
      %v806 = vrot.slane %v580, 2
      %v807 = vsel %vm754, %v805, %v806
      %v808 = vrot.slane %v581, 2
      %v809 = vsel %vm754, %v806, %v808
      %v810 = vrot.slane %v582, 2
      %v811 = vrot.slane %v583, 2
      %v812 = vsel %vm754, %v810, %v811
      %v813 = vrot.slane %v584, 2
      %v814 = vsel %vm754, %v811, %v813
      %815 = vrot.lane.b32.xlu0 %v757, 8
      %v816 = vpop.permute.xlu0 %815
      %817 = vrot.lane.b32.xlu0 %v759, 8
      %v818 = vpop.permute.xlu0 %817
      %819 = vrot.lane.b32.xlu0 %v762, 8
      %v820 = vpop.permute.xlu0 %819
      %821 = vrot.lane.b32.xlu0 %v764, 8
      %v822 = vpop.permute.xlu0 %821
      %823 = vrot.lane.b32.xlu0 %v767, 8
      %v824 = vpop.permute.xlu0 %823
      %825 = vrot.lane.b32.xlu0 %v769, 8
      %v826 = vpop.permute.xlu0 %825
      %827 = vrot.lane.b32.xlu0 %v772, 8
      %v828 = vpop.permute.xlu0 %827
      %829 = vrot.lane.b32.xlu0 %v774, 8
      %v830 = vpop.permute.xlu0 %829
      %831 = vrot.lane.b32.xlu0 %v777, 8
      %v832 = vpop.permute.xlu0 %831
      %833 = vrot.lane.b32.xlu0 %v779, 8
      %v834 = vpop.permute.xlu0 %833
      %835 = vrot.lane.b32.xlu0 %v782, 8
      %v836 = vpop.permute.xlu0 %835
      %837 = vrot.lane.b32.xlu0 %v784, 8
      %v838 = vpop.permute.xlu0 %837
      %839 = vrot.lane.b32.xlu0 %v787, 8
      %v840 = vpop.permute.xlu0 %839
      %841 = vrot.lane.b32.xlu0 %v789, 8
      %v842 = vpop.permute.xlu0 %841
      %843 = vrot.lane.b32.xlu0 %v792, 8
      %v844 = vpop.permute.xlu0 %843
      %845 = vrot.lane.b32.xlu0 %v794, 8
      %v846 = vpop.permute.xlu0 %845
      %847 = vrot.lane.b32.xlu0 %v797, 8
      %v848 = vpop.permute.xlu0 %847
      %849 = vrot.lane.b32.xlu0 %v799, 8
      %v850 = vpop.permute.xlu0 %849
      %851 = vrot.lane.b32.xlu0 %v802, 8
      %v852 = vpop.permute.xlu0 %851
      %853 = vrot.lane.b32.xlu0 %v804, 8
      %v854 = vpop.permute.xlu0 %853
      %855 = vrot.lane.b32.xlu0 %v807, 8
      %v856 = vpop.permute.xlu0 %855
      %857 = vrot.lane.b32.xlu0 %v809, 8
      %v858 = vpop.permute.xlu0 %857
      %859 = vrot.lane.b32.xlu0 %v812, 8
      %v860 = vpop.permute.xlu0 %859
      %861 = vrot.lane.b32.xlu0 %v814, 8
      %v862 = vpop.permute.xlu0 %861
      %v887 = vsel %vm499, %v549, %v683
      %v888 = vsel %vm499, %v550, %v685
      %v889 = vsel %vm499, %v552, %v687
      %v890 = vsel %vm499, %v553, %v689
      %v891 = vsel %vm499, %v555, %v691
      %v892 = vsel %vm499, %v556, %v693
      %v893 = vsel %vm499, %v558, %v695
      %v894 = vsel %vm499, %v559, %v697
      %v895 = vsel %vm499, %v561, %v699
      %v896 = vsel %vm499, %v562, %v701
      %v897 = vsel %vm499, %v564, %v703
      %v898 = vsel %vm499, %v565, %v705
      %v899 = vsel %vm499, %v567, %v707
      %v900 = vsel %vm499, %v568, %v709
      %v901 = vsel %vm499, %v570, %v711
      %v902 = vsel %vm499, %v571, %v713
      %v903 = vsel %vm499, %v573, %v715
      %v904 = vsel %vm499, %v574, %v717
      %v905 = vsel %vm499, %v576, %v719
      %v906 = vsel %vm499, %v577, %v721
      %v907 = vsel %vm499, %v579, %v723
      %v908 = vsel %vm499, %v580, %v725
      %v909 = vsel %vm499, %v582, %v727
      %v910 = vsel %vm499, %v583, %v729
      %vm911 = vcmask 64512
      %v912 = vsel %vm911, %v887, %v816
      %v913 = vsel %vm911, %v888, %v818
      %v914 = vsel %vm911, %v889, %v820
      %v915 = vsel %vm911, %v890, %v822
      %v916 = vsel %vm911, %v891, %v824
      %v917 = vsel %vm911, %v892, %v826
      %v918 = vsel %vm911, %v893, %v828
      %v919 = vsel %vm911, %v894, %v830
      %v920 = vsel %vm911, %v895, %v832
      %v921 = vsel %vm911, %v896, %v834
      %v922 = vsel %vm911, %v897, %v836
      %v923 = vsel %vm911, %v898, %v838
      %v924 = vsel %vm911, %v899, %v840
      %v925 = vsel %vm911, %v900, %v842
      %v926 = vsel %vm911, %v901, %v844
      %v927 = vsel %vm911, %v902, %v846
      %v928 = vsel %vm911, %v903, %v848
      %v929 = vsel %vm911, %v904, %v850
      %v930 = vsel %vm911, %v905, %v852
      %v931 = vsel %vm911, %v906, %v854
      %v932 = vsel %vm911, %v907, %v856
      %v933 = vsel %vm911, %v908, %v858
      %v934 = vsel %vm911, %v909, %v860
      %v935 = vsel %vm911, %v910, %v862
      %956 = vrot.lane.b32.xlu0 %v914, 12
      %v957 = vpop.permute.xlu0 %956
      %958 = vrot.lane.b32.xlu0 %v915, 12
      %v959 = vpop.permute.xlu0 %958
      %960 = vrot.lane.b32.xlu0 %v916, 12
      %v961 = vpop.permute.xlu0 %960
      %962 = vrot.lane.b32.xlu0 %v917, 12
      %v963 = vpop.permute.xlu0 %962
      %964 = vrot.lane.b32.xlu0 %v918, 12
      %v965 = vpop.permute.xlu0 %964
      %966 = vrot.lane.b32.xlu0 %v919, 12
      %v967 = vpop.permute.xlu0 %966
      %968 = vrot.lane.b32.xlu0 %v920, 12
      %v969 = vpop.permute.xlu0 %968
      %970 = vrot.lane.b32.xlu0 %v921, 12
      %v971 = vpop.permute.xlu0 %970
      %972 = vrot.lane.b32.xlu0 %v922, 12
      %v973 = vpop.permute.xlu0 %972
      %974 = vrot.lane.b32.xlu0 %v923, 12
      %v975 = vpop.permute.xlu0 %974
      %976 = vrot.lane.b32.xlu0 %v924, 12
      %v977 = vpop.permute.xlu0 %976
      %978 = vrot.lane.b32.xlu0 %v925, 12
      %v979 = vpop.permute.xlu0 %978
      %980 = vrot.lane.b32.xlu0 %v926, 12
      %v981 = vpop.permute.xlu0 %980
      %982 = vrot.lane.b32.xlu0 %v927, 12
      %v983 = vpop.permute.xlu0 %982
      %984 = vrot.lane.b32.xlu0 %v928, 12
      %v985 = vpop.permute.xlu0 %984
      %986 = vrot.lane.b32.xlu0 %v929, 12
      %v987 = vpop.permute.xlu0 %986
      %988 = vrot.lane.b32.xlu0 %v930, 12
      %v989 = vpop.permute.xlu0 %988
      %990 = vrot.lane.b32.xlu0 %v931, 12
      %v991 = vpop.permute.xlu0 %990
      %992 = vrot.lane.b32.xlu0 %v932, 12
      %v993 = vpop.permute.xlu0 %992
      %994 = vrot.lane.b32.xlu0 %v933, 12
      %v995 = vpop.permute.xlu0 %994
      %1018 = vrot.lane.b32.xlu0 %v916, 24
      %v1019 = vpop.permute.xlu0 %1018
      %1020 = vrot.lane.b32.xlu0 %v917, 24
      %v1021 = vpop.permute.xlu0 %1020
      %1022 = vrot.lane.b32.xlu0 %v918, 24
      %v1023 = vpop.permute.xlu0 %1022
      %1024 = vrot.lane.b32.xlu0 %v919, 24
      %v1025 = vpop.permute.xlu0 %1024
      %1026 = vrot.lane.b32.xlu0 %v920, 24
      %v1027 = vpop.permute.xlu0 %1026
      %1028 = vrot.lane.b32.xlu0 %v921, 24
      %v1029 = vpop.permute.xlu0 %1028
      %1030 = vrot.lane.b32.xlu0 %v922, 24
      %v1031 = vpop.permute.xlu0 %1030
      %1032 = vrot.lane.b32.xlu0 %v923, 24
      %v1033 = vpop.permute.xlu0 %1032
      %1034 = vrot.lane.b32.xlu0 %v924, 24
      %v1035 = vpop.permute.xlu0 %1034
      %1036 = vrot.lane.b32.xlu0 %v925, 24
      %v1037 = vpop.permute.xlu0 %1036
      %1038 = vrot.lane.b32.xlu0 %v926, 24
      %v1039 = vpop.permute.xlu0 %1038
      %1040 = vrot.lane.b32.xlu0 %v927, 24
      %v1041 = vpop.permute.xlu0 %1040
      %1042 = vrot.lane.b32.xlu0 %v928, 24
      %v1043 = vpop.permute.xlu0 %1042
      %1044 = vrot.lane.b32.xlu0 %v929, 24
      %v1045 = vpop.permute.xlu0 %1044
      %1046 = vrot.lane.b32.xlu0 %v930, 24
      %v1047 = vpop.permute.xlu0 %1046
      %1048 = vrot.lane.b32.xlu0 %v931, 24
      %v1049 = vpop.permute.xlu0 %1048
      %1050 = vrot.lane.b32.xlu0 %v932, 24
      %v1051 = vpop.permute.xlu0 %1050
      %1052 = vrot.lane.b32.xlu0 %v933, 24
      %v1053 = vpop.permute.xlu0 %1052
      %1054 = vrot.lane.b32.xlu0 %v934, 24
      %v1055 = vpop.permute.xlu0 %1054
      %1056 = vrot.lane.b32.xlu0 %v935, 24
      %v1057 = vpop.permute.xlu0 %1056
      %vm1078 = vcmask 97280
      %v1079 = vsel %vm1078, %v912, %v957
      %v1080 = vsel %vm1078, %v913, %v959
      %v1081 = vsel %vm1078, %v914, %v961
      %v1082 = vsel %vm1078, %v915, %v963
      %v1083 = vsel %vm1078, %v916, %v965
      %v1084 = vsel %vm1078, %v917, %v967
      %v1085 = vsel %vm1078, %v918, %v969
      %v1086 = vsel %vm1078, %v919, %v971
      %v1087 = vsel %vm1078, %v920, %v973
      %v1088 = vsel %vm1078, %v921, %v975
      %v1089 = vsel %vm1078, %v922, %v977
      %v1090 = vsel %vm1078, %v923, %v979
      %v1091 = vsel %vm1078, %v924, %v981
      %v1092 = vsel %vm1078, %v925, %v983
      %v1093 = vsel %vm1078, %v926, %v985
      %v1094 = vsel %vm1078, %v927, %v987
      %v1095 = vsel %vm1078, %v928, %v989
      %v1096 = vsel %vm1078, %v929, %v991
      %v1097 = vsel %vm1078, %v930, %v993
      %v1098 = vsel %vm1078, %v931, %v995
      %vm1099 = vcmask 195584
      %v1100 = vsel %vm1099, %v1079, %v1019
      %v1101 = vsel %vm1099, %v1080, %v1021
      %v1102 = vsel %vm1099, %v1081, %v1023
      %v1103 = vsel %vm1099, %v1082, %v1025
      %v1104 = vsel %vm1099, %v1083, %v1027
      %v1105 = vsel %vm1099, %v1084, %v1029
      %v1106 = vsel %vm1099, %v1085, %v1031
      %v1107 = vsel %vm1099, %v1086, %v1033
      %v1108 = vsel %vm1099, %v1087, %v1035
      %v1109 = vsel %vm1099, %v1088, %v1037
      %v1110 = vsel %vm1099, %v1089, %v1039
      %v1111 = vsel %vm1099, %v1090, %v1041
      %v1112 = vsel %vm1099, %v1091, %v1043
      %v1113 = vsel %vm1099, %v1092, %v1045
      %v1114 = vsel %vm1099, %v1093, %v1047
      %v1115 = vsel %vm1099, %v1094, %v1049
      %v1116 = vsel %vm1099, %v1095, %v1051
      %v1117 = vsel %vm1099, %v1096, %v1053
      %v1118 = vsel %vm1099, %v1097, %v1055
      %v1119 = vsel %vm1099, %v1098, %v1057
      %v1120 = vld [vmem:[%s3] sm:$0xff]
      %v1121 = vld [vmem:[%s3 + $0x8] sm:$0xff]
      %v1122 = vld [vmem:[%s3 + $0x10] sm:$0xff]
      %v1123 = vld [vmem:[%s3 + $0x18] sm:$0xff]
      %v1124 = vld [vmem:[%s3 + $0x20] sm:$0xf]
      %v1125 = vld [vmem:[%s4] sm:$0x1]
      %v1127 = vlaneseq
      %v1128 = vshrl.u32 %v1127, 7
      %v1129 = vsub.s32 0, %v1128
      %v1130 = vrot.slane %v1125, %v1129
      %vm1132 = vcmask 293888
      %v1134 = vsel %vm1132, %v1100, 0
      %v1137 = vsel %vm1132, %v1101, 0
      %v1140 = vsel %vm1132, %v1102, 0
      %v1143 = vsel %vm1132, %v1103, 0
      %v1146 = vsel %vm1132, %v1104, 0
      %v1149 = vsel %vm1132, %v1105, 0
      %v1152 = vsel %vm1132, %v1106, 0
      %v1155 = vsel %vm1132, %v1107, 0
      %v1158 = vsel %vm1132, %v1108, 0
      %v1161 = vsel %vm1132, %v1109, 0
      %v1164 = vsel %vm1132, %v1110, 0
      %v1167 = vsel %vm1132, %v1111, 0
      %v1170 = vsel %vm1132, %v1112, 0
      %v1173 = vsel %vm1132, %v1113, 0
      %v1176 = vsel %vm1132, %v1114, 0
      %v1179 = vsel %vm1132, %v1115, 0
      %v1182 = vsel %vm1132, %v1116, 0
      %v1185 = vsel %vm1132, %v1117, 0
      %v1188 = vsel %vm1132, %v1118, 0
      %v1191 = vsel %vm1132, %v1119, 0
      %vm1193 = vcmask 1043456
      %v1195 = vsel %vm1193, %v1124, 0
      %1197 = vmatprep.subr.mxu0 0.0
      %1198 = vmatpush1.msra.mxu0 %v1120
      %1199 = vmatprep.subr.mxu0 0.0
      %1200 = vmatpush1.msra.mxu0 %v1121
      %1201 = vmatprep.subr.mxu0 0.0
      %1202 = vmatpush1.msra.mxu0 %v1122
      %1203 = vmatprep.subr.mxu0 0.0
      %1204 = vmatpush1.msra.mxu0 %v1123
      %1205 = vmatprep.subr.mxu0 0.0
      %1206 = vmatpush1.msra.mxu0 %v1195
      %1207 = vmatprep.subr.mxu0 0.0
      %1208 = vmatpush1.msra.mxu0 0.0
      %1209 = vmatprep.subr.mxu0 0.0
      %1210 = vmatpush1.msra.mxu0 0.0
      %1211 = vmatprep.subr.mxu0 0.0
      %1212 = vmatpush1.msra.mxu0 0.0
      %1213 = vmatprep.subr.mxu0 0.0
      %1214 = vmatpush1.msra.mxu0 0.0
      %1215 = vmatprep.subr.mxu0 0.0
      %1216 = vmatpush1.msra.mxu0 0.0
      %1217 = vmatprep.subr.mxu0 0.0
      %1218 = vmatpush1.msra.mxu0 0.0
      %1219 = vmatprep.subr.mxu0 0.0
      %1220 = vmatpush1.msra.mxu0 0.0
      %1221 = vmatprep.subr.mxu0 0.0
      %1222 = vmatpush1.msra.mxu0 0.0
      %1223 = vmatprep.subr.mxu0 0.0
      %1224 = vmatpush1.msra.mxu0 0.0
      %1225 = vmatprep.subr.mxu0 0.0
      %1226 = vmatpush1.msra.mxu0 0.0
      %1227 = vmatprep.subr.mxu0 0.0
      %1228 = vmatpush1.msra.mxu0 0.0
      %1229 = vmatprep.subr.mxu0 0.0
      %1230 = vmatpush1.msra.mxu0 0.0
      %1231 = vmatprep.subr.mxu0 0.0
      %1232 = vmatpush1.msra.mxu0 0.0
      %1233 = vmatprep.subr.mxu0 0.0
      %1234 = vmatpush1.msra.mxu0 0.0
      %1235 = vmatprep.subr.mxu0 0.0
      %1236 = vmatpush1.msra.mxu0 0.0
      %1237 = vmatprep.subr.mxu0 0.0
      %1238 = vmatpush1.msra.mxu0 0.0
      %1239 = vmatprep.subr.mxu0 0.0
      %1240 = vmatpush1.msra.mxu0 0.0
      %1241 = vmatprep.subr.mxu0 0.0
      %1242 = vmatpush1.msra.mxu0 0.0
      %1243 = vmatprep.subr.mxu0 0.0
      %1244 = vmatpush1.msra.mxu0 0.0
      %1245 = vmatprep.subr.mxu0 0.0
      %1246 = vmatpush1.msra.mxu0 0.0
      %1247 = vmatprep.subr.mxu0 0.0
      %1248 = vmatpush1.msra.mxu0 0.0
      %1249 = vmatprep.subr.mxu0 0.0
      %1250 = vmatpush1.msra.mxu0 0.0
      %1251 = vmatprep.subr.mxu0 0.0
      %1252 = vmatpush1.msra.mxu0 0.0
      %1253 = vmatprep.subr.mxu0 0.0
      %1254 = vmatpush1.msra.mxu0 0.0
      %1255 = vmatprep.subr.mxu0 0.0
      %1256 = vmatpush1.msra.mxu0 0.0
      %1257 = vmatprep.subr.mxu0 0.0
      %1258 = vmatpush1.msra.mxu0 0.0
      %1259 = vmatprep.subr.mxu0 0.0
      %1260 = vmatpush1.msra.mxu0 0.0
      %1261 = vmatprep.mubr.f32.mxu0 0.0
      %1262 = vmatmul.mubr.f32.gmra.mrb[0].mxu0 %v1134
      %v1263 = vpop.f32.mrb[0].mxu0
      %v1264 = vadd.f32 %v1130, %v1263
      %v1265 = vpop.f32.mrb[0].mxu0
      %1266 = vmatprep.mubr.f32.mxu0 0.0
      %1267 = vmatmul.mubr.f32.gmra.mrb[0].mxu0 %v1137
      %v1268 = vpop.f32.mrb[0].mxu0
      %v1269 = vadd.f32 %v1130, %v1268
      %v1270 = vpop.f32.mrb[0].mxu0
      %1271 = vmatprep.mubr.f32.mxu0 0.0
      %1272 = vmatmul.mubr.f32.gmra.mrb[0].mxu0 %v1140
      %v1273 = vpop.f32.mrb[0].mxu0
      %v1274 = vadd.f32 %v1130, %v1273
      %v1275 = vpop.f32.mrb[0].mxu0
      %1276 = vmatprep.mubr.f32.mxu0 0.0
      %1277 = vmatmul.mubr.f32.gmra.mrb[0].mxu0 %v1143
      %v1278 = vpop.f32.mrb[0].mxu0
      %v1279 = vadd.f32 %v1130, %v1278
      %v1280 = vpop.f32.mrb[0].mxu0
      %1281 = vmatprep.mubr.f32.mxu0 0.0
      %1282 = vmatmul.mubr.f32.gmra.mrb[0].mxu0 %v1146
      %v1283 = vpop.f32.mrb[0].mxu0
      %v1284 = vadd.f32 %v1130, %v1283
      %v1285 = vpop.f32.mrb[0].mxu0
      %1286 = vmatprep.mubr.f32.mxu0 0.0
      %1287 = vmatmul.mubr.f32.gmra.mrb[0].mxu0 %v1149
      %v1288 = vpop.f32.mrb[0].mxu0
      %v1289 = vadd.f32 %v1130, %v1288
      %v1290 = vpop.f32.mrb[0].mxu0
      %1291 = vmatprep.mubr.f32.mxu0 0.0
      %1292 = vmatmul.mubr.f32.gmra.mrb[0].mxu0 %v1152
      %v1293 = vpop.f32.mrb[0].mxu0
      %v1294 = vadd.f32 %v1130, %v1293
      %v1295 = vpop.f32.mrb[0].mxu0
      %1296 = vmatprep.mubr.f32.mxu0 0.0
      %1297 = vmatmul.mubr.f32.gmra.mrb[0].mxu0 %v1155
      %v1298 = vpop.f32.mrb[0].mxu0
      %v1299 = vadd.f32 %v1130, %v1298
      %v1300 = vpop.f32.mrb[0].mxu0
      %1301 = vmatprep.mubr.f32.mxu0 0.0
      %1302 = vmatmul.mubr.f32.gmra.mrb[0].mxu0 %v1158
      %v1303 = vpop.f32.mrb[0].mxu0
      %v1304 = vadd.f32 %v1130, %v1303
      %v1305 = vpop.f32.mrb[0].mxu0
      %1306 = vmatprep.mubr.f32.mxu0 0.0
      %1307 = vmatmul.mubr.f32.gmra.mrb[0].mxu0 %v1161
      %v1308 = vpop.f32.mrb[0].mxu0
      %v1309 = vadd.f32 %v1130, %v1308
      %v1310 = vpop.f32.mrb[0].mxu0
      %1311 = vmatprep.mubr.f32.mxu0 0.0
      %1312 = vmatmul.mubr.f32.gmra.mrb[0].mxu0 %v1164
      %v1313 = vpop.f32.mrb[0].mxu0
      %v1314 = vadd.f32 %v1130, %v1313
      %v1315 = vpop.f32.mrb[0].mxu0
      %1316 = vmatprep.mubr.f32.mxu0 0.0
      %1317 = vmatmul.mubr.f32.gmra.mrb[0].mxu0 %v1167
      %v1318 = vpop.f32.mrb[0].mxu0
      %v1319 = vadd.f32 %v1130, %v1318
      %v1320 = vpop.f32.mrb[0].mxu0
      %1321 = vmatprep.mubr.f32.mxu0 0.0
      %1322 = vmatmul.mubr.f32.gmra.mrb[0].mxu0 %v1170
      %v1323 = vpop.f32.mrb[0].mxu0
      %v1324 = vadd.f32 %v1130, %v1323
      %v1325 = vpop.f32.mrb[0].mxu0
      %1326 = vmatprep.mubr.f32.mxu0 0.0
      %1327 = vmatmul.mubr.f32.gmra.mrb[0].mxu0 %v1173
      %v1328 = vpop.f32.mrb[0].mxu0
      %v1329 = vadd.f32 %v1130, %v1328
      %v1330 = vpop.f32.mrb[0].mxu0
      %1331 = vmatprep.mubr.f32.mxu0 0.0
      %1332 = vmatmul.mubr.f32.gmra.mrb[0].mxu0 %v1176
      %v1333 = vpop.f32.mrb[0].mxu0
      %v1334 = vadd.f32 %v1130, %v1333
      %v1335 = vpop.f32.mrb[0].mxu0
      %1336 = vmatprep.mubr.f32.mxu0 0.0
      %1337 = vmatmul.mubr.f32.gmra.mrb[0].mxu0 %v1179
      %v1338 = vpop.f32.mrb[0].mxu0
      %v1339 = vadd.f32 %v1130, %v1338
      %v1340 = vpop.f32.mrb[0].mxu0
      %1341 = vmatprep.mubr.f32.mxu0 0.0
      %1342 = vmatmul.mubr.f32.gmra.mrb[0].mxu0 %v1182
      %v1343 = vpop.f32.mrb[0].mxu0
      %v1344 = vadd.f32 %v1130, %v1343
      %v1345 = vpop.f32.mrb[0].mxu0
      %1346 = vmatprep.mubr.f32.mxu0 0.0
      %1347 = vmatmul.mubr.f32.gmra.mrb[0].mxu0 %v1185
      %v1348 = vpop.f32.mrb[0].mxu0
      %v1349 = vadd.f32 %v1130, %v1348
      %v1350 = vpop.f32.mrb[0].mxu0
      %1351 = vmatprep.mubr.f32.mxu0 0.0
      %1352 = vmatmul.mubr.f32.gmra.mrb[0].mxu0 %v1188
      %v1353 = vpop.f32.mrb[0].mxu0
      %v1354 = vadd.f32 %v1130, %v1353
      %v1355 = vpop.f32.mrb[0].mxu0
      %1356 = vmatprep.mubr.f32.mxu0 0.0
      %1357 = vmatmul.mubr.f32.gmra.mrb[0].mxu0 %v1191
      %v1358 = vpop.f32.mrb[0].mxu0
      %v1359 = vadd.f32 %v1130, %v1358
      %v1360 = vpop.f32.mrb[0].mxu0
      %1361 = vdwg.mxu0
      %v1362 = vmax.f32 %v1264, 0.0
      %v1363 = vmax.f32 %v1269, 0.0
      %v1364 = vmax.f32 %v1274, 0.0
      %v1365 = vmax.f32 %v1279, 0.0
      %v1366 = vmax.f32 %v1284, 0.0
      %v1367 = vmax.f32 %v1289, 0.0
      %v1368 = vmax.f32 %v1294, 0.0
      %v1369 = vmax.f32 %v1299, 0.0
      %v1370 = vmax.f32 %v1304, 0.0
      %v1371 = vmax.f32 %v1309, 0.0
      %v1372 = vmax.f32 %v1314, 0.0
      %v1373 = vmax.f32 %v1319, 0.0
      %v1374 = vmax.f32 %v1324, 0.0
      %v1375 = vmax.f32 %v1329, 0.0
      %v1376 = vmax.f32 %v1334, 0.0
      %v1377 = vmax.f32 %v1339, 0.0
      %v1378 = vmax.f32 %v1344, 0.0
      %v1379 = vmax.f32 %v1349, 0.0
      %v1380 = vmax.f32 %v1354, 0.0
      %v1381 = vmax.f32 %v1359, 0.0
      %vm1382 = vcmask 57344
      %1383 = vst.msk [vmem:[#allocation3] sm:$0x1] %vm1382, 0.0
      %1384 = vst.msk [vmem:[#allocation3 + $0x18] sm:$0x1] %vm1382, 0.0
      %1385 = vst.msk [vmem:[#allocation3 + $0x30] sm:$0x1] %vm1382, 0.0
      %1386 = vst.msk [vmem:[#allocation3 + $0x48] sm:$0x1] %vm1382, 0.0
      %1387 = vst.msk [vmem:[#allocation3 + $0x60] sm:$0x1] %vm1382, 0.0
      %1388 = vst.msk [vmem:[#allocation3 + $0x78] sm:$0x1] %vm1382, 0.0
      %1389 = vst.msk [vmem:[#allocation3 + $0x90] sm:$0x1] %vm1382, 0.0
      %1390 = vst.msk [vmem:[#allocation3 + $0xa8] sm:$0x1] %vm1382, 0.0
      %1391 = vst.msk [vmem:[#allocation3 + $0xc0] sm:$0x1] %vm1382, 0.0
      %1392 = vst.msk [vmem:[#allocation3 + $0xd8] sm:$0x1] %vm1382, 0.0
      %1393 = vst.msk [vmem:[#allocation3 + $0x11] sm:$0x1] %vm1382, 0.0
      %1394 = vst.msk [vmem:[#allocation3 + $0x29] sm:$0x1] %vm1382, 0.0
      %1395 = vst.msk [vmem:[#allocation3 + $0x41] sm:$0x1] %vm1382, 0.0
      %1396 = vst.msk [vmem:[#allocation3 + $0x59] sm:$0x1] %vm1382, 0.0
      %1397 = vst.msk [vmem:[#allocation3 + $0x71] sm:$0x1] %vm1382, 0.0
      %1398 = vst.msk [vmem:[#allocation3 + $0x89] sm:$0x1] %vm1382, 0.0
      %1399 = vst.msk [vmem:[#allocation3 + $0xa1] sm:$0x1] %vm1382, 0.0
      %1400 = vst.msk [vmem:[#allocation3 + $0xb9] sm:$0x1] %vm1382, 0.0
      %1401 = vst.msk [vmem:[#allocation3 + $0xd1] sm:$0x1] %vm1382, 0.0
      %1402 = vst.msk [vmem:[#allocation3 + $0xe9] sm:$0x1] %vm1382, 0.0
      %1403 = vst.msk [vmem:[#allocation3 + $0x1] sm:$0xff] %vm911, %v1362
      %1404 = vst.msk [vmem:[#allocation3 + $0x9] sm:$0xff] %vm911, %v1363
      %1405 = vst.msk [vmem:[#allocation3 + $0x19] sm:$0xff] %vm911, %v1364
      %1406 = vst.msk [vmem:[#allocation3 + $0x21] sm:$0xff] %vm911, %v1365
      %1407 = vst.msk [vmem:[#allocation3 + $0x31] sm:$0xff] %vm911, %v1366
      %1408 = vst.msk [vmem:[#allocation3 + $0x39] sm:$0xff] %vm911, %v1367
      %1409 = vst.msk [vmem:[#allocation3 + $0x49] sm:$0xff] %vm911, %v1368
      %1410 = vst.msk [vmem:[#allocation3 + $0x51] sm:$0xff] %vm911, %v1369
      %1411 = vst.msk [vmem:[#allocation3 + $0x61] sm:$0xff] %vm911, %v1370
      %1412 = vst.msk [vmem:[#allocation3 + $0x69] sm:$0xff] %vm911, %v1371
      %1413 = vst.msk [vmem:[#allocation3 + $0x79] sm:$0xff] %vm911, %v1372
      %1414 = vst.msk [vmem:[#allocation3 + $0x81] sm:$0xff] %vm911, %v1373
      %1415 = vst.msk [vmem:[#allocation3 + $0x91] sm:$0xff] %vm911, %v1374
      %1416 = vst.msk [vmem:[#allocation3 + $0x99] sm:$0xff] %vm911, %v1375
      %1417 = vst.msk [vmem:[#allocation3 + $0xa9] sm:$0xff] %vm911, %v1376
      %1418 = vst.msk [vmem:[#allocation3 + $0xb1] sm:$0xff] %vm911, %v1377
      %1419 = vst.msk [vmem:[#allocation3 + $0xc1] sm:$0xff] %vm911, %v1378
      %1420 = vst.msk [vmem:[#allocation3 + $0xc9] sm:$0xff] %vm911, %v1379
      %1421 = vst.msk [vmem:[#allocation3 + $0xd9] sm:$0xff] %vm911, %v1380
      %1422 = vst.msk [vmem:[#allocation3 + $0xe1] sm:$0xff] %vm911, %v1381
      // Predicated region
      $region57: #{double_conv_pallas.1} parent=47 // pred_check
        %p1423 = pneg %p533
      $region58: #{double_conv_pallas.1} parent=47 // pred_check_branch
        %1425 = sbr.rel (%p1423) target = $region60
      $region59: #{double_conv_pallas.1} parent=47 // pred_region
        %1426 = vst.msk [vmem:[#allocation3] sm:$0xff] %vm911, 0.0
        %1427 = vst.msk [vmem:[#allocation3 + $0x8] sm:$0xff] %vm911, 0.0
        %vm1428 = vcmask 58368
        %1429 = vst.msk [vmem:[#allocation3 + $0x10] sm:$0x3] %vm1428, 0.0
      $region60: #{double_conv_pallas.1} parent=47 // pred_fallthru
        _
      // Predicated region
      $region61: #{double_conv_pallas.1} parent=47 // pred_check
        %p1430 = pneg %p541
      $region62: #{double_conv_pallas.1} parent=47 // pred_check_branch
        %1432 = sbr.rel (%p1430) target = $region64
      $region63: #{double_conv_pallas.1} parent=47 // pred_region
        %s1433 = scalar_lea.vmem [#allocation3], 216
        %1434 = vst.msk [vmem:[%s1433] sm:$0xff] %vm911, 0.0
        %1435 = vst.msk [vmem:[%s1433 + $0x8] sm:$0xff] %vm911, 0.0
        %vm1436 = vcmask 58368
        %1437 = vst.msk [vmem:[%s1433 + $0x10] sm:$0x3] %vm1436, 0.0
      $region64: #{double_conv_pallas.1} parent=47 // pred_fallthru
        _
      %v1438 = vld [vmem:[#allocation3] sm:$0xff]
      %v1439 = vld [vmem:[#allocation3 + $0x8] sm:$0xff]
      %v1440 = vld [vmem:[#allocation3 + $0x10] sm:$0x3]
      %v1441 = vld [vmem:[#allocation3 + $0x18] sm:$0xff]
      %v1442 = vld [vmem:[#allocation3 + $0x20] sm:$0xff]
      %v1443 = vld [vmem:[#allocation3 + $0x28] sm:$0x3]
      %v1444 = vld [vmem:[#allocation3 + $0x30] sm:$0xff]
      %v1445 = vld [vmem:[#allocation3 + $0x38] sm:$0xff]
      %v1446 = vld [vmem:[#allocation3 + $0x40] sm:$0x3]
      %v1447 = vld [vmem:[#allocation3 + $0x48] sm:$0xff]
      %v1448 = vld [vmem:[#allocation3 + $0x50] sm:$0xff]
      %v1449 = vld [vmem:[#allocation3 + $0x58] sm:$0x3]
      %v1450 = vld [vmem:[#allocation3 + $0x60] sm:$0xff]
      %v1451 = vld [vmem:[#allocation3 + $0x68] sm:$0xff]
      %v1452 = vld [vmem:[#allocation3 + $0x70] sm:$0x3]
      %v1453 = vld [vmem:[#allocation3 + $0x78] sm:$0xff]
      %v1454 = vld [vmem:[#allocation3 + $0x80] sm:$0xff]
      %v1455 = vld [vmem:[#allocation3 + $0x88] sm:$0x3]
      %v1456 = vld [vmem:[#allocation3 + $0x90] sm:$0xff]
      %v1457 = vld [vmem:[#allocation3 + $0x98] sm:$0xff]
      %v1458 = vld [vmem:[#allocation3 + $0xa0] sm:$0x3]
      %v1459 = vld [vmem:[#allocation3 + $0xa8] sm:$0xff]
      %v1460 = vld [vmem:[#allocation3 + $0xb0] sm:$0xff]
      %v1461 = vld [vmem:[#allocation3 + $0xb8] sm:$0x3]
      %v1462 = vld [vmem:[#allocation3 + $0xc0] sm:$0xff]
      %v1463 = vld [vmem:[#allocation3 + $0xc8] sm:$0xff]
      %v1464 = vld [vmem:[#allocation3 + $0xd0] sm:$0x3]
      %v1465 = vld [vmem:[#allocation3 + $0xd8] sm:$0xff]
      %v1466 = vld [vmem:[#allocation3 + $0xe0] sm:$0xff]
      %v1467 = vld [vmem:[#allocation3 + $0xe8] sm:$0x3]
      %v1498 = vrot.slane %v1438, 1
      %v1499 = vrot.slane %v1439, 1
      %v1500 = vsel %vm621, %v1498, %v1499
      %v1501 = vrot.slane %v1440, 1
      %v1502 = vsel %vm621, %v1499, %v1501
      %v1503 = vrot.slane %v1441, 1
      %v1504 = vrot.slane %v1442, 1
      %v1505 = vsel %vm621, %v1503, %v1504
      %v1506 = vrot.slane %v1443, 1
      %v1507 = vsel %vm621, %v1504, %v1506
      %v1508 = vrot.slane %v1444, 1
      %v1509 = vrot.slane %v1445, 1
      %v1510 = vsel %vm621, %v1508, %v1509
      %v1511 = vrot.slane %v1446, 1
      %v1512 = vsel %vm621, %v1509, %v1511
      %v1513 = vrot.slane %v1447, 1
      %v1514 = vrot.slane %v1448, 1
      %v1515 = vsel %vm621, %v1513, %v1514
      %v1516 = vrot.slane %v1449, 1
      %v1517 = vsel %vm621, %v1514, %v1516
      %v1518 = vrot.slane %v1450, 1
      %v1519 = vrot.slane %v1451, 1
      %v1520 = vsel %vm621, %v1518, %v1519
      %v1521 = vrot.slane %v1452, 1
      %v1522 = vsel %vm621, %v1519, %v1521
      %v1523 = vrot.slane %v1453, 1
      %v1524 = vrot.slane %v1454, 1
      %v1525 = vsel %vm621, %v1523, %v1524
      %v1526 = vrot.slane %v1455, 1
      %v1527 = vsel %vm621, %v1524, %v1526
      %v1528 = vrot.slane %v1456, 1
      %v1529 = vrot.slane %v1457, 1
      %v1530 = vsel %vm621, %v1528, %v1529
      %v1531 = vrot.slane %v1458, 1
      %v1532 = vsel %vm621, %v1529, %v1531
      %v1533 = vrot.slane %v1459, 1
      %v1534 = vrot.slane %v1460, 1
      %v1535 = vsel %vm621, %v1533, %v1534
      %v1536 = vrot.slane %v1461, 1
      %v1537 = vsel %vm621, %v1534, %v1536
      %v1538 = vrot.slane %v1462, 1
      %v1539 = vrot.slane %v1463, 1
      %v1540 = vsel %vm621, %v1538, %v1539
      %v1541 = vrot.slane %v1464, 1
      %v1542 = vsel %vm621, %v1539, %v1541
      %v1543 = vrot.slane %v1465, 1
      %v1544 = vrot.slane %v1466, 1
      %v1545 = vsel %vm621, %v1543, %v1544
      %v1546 = vrot.slane %v1467, 1
      %v1547 = vsel %vm621, %v1544, %v1546
      %1548 = vrot.lane.b32.xlu0 %v1500, 8
      %v1549 = vpop.permute.xlu0 %1548
      %1550 = vrot.lane.b32.xlu0 %v1502, 8
      %v1551 = vpop.permute.xlu0 %1550
      %1552 = vrot.lane.b32.xlu0 %v1505, 8
      %v1553 = vpop.permute.xlu0 %1552
      %1554 = vrot.lane.b32.xlu0 %v1507, 8
      %v1555 = vpop.permute.xlu0 %1554
      %1556 = vrot.lane.b32.xlu0 %v1510, 8
      %v1557 = vpop.permute.xlu0 %1556
      %1558 = vrot.lane.b32.xlu0 %v1512, 8
      %v1559 = vpop.permute.xlu0 %1558
      %1560 = vrot.lane.b32.xlu0 %v1515, 8
      %v1561 = vpop.permute.xlu0 %1560
      %1562 = vrot.lane.b32.xlu0 %v1517, 8
      %v1563 = vpop.permute.xlu0 %1562
      %1564 = vrot.lane.b32.xlu0 %v1520, 8
      %v1565 = vpop.permute.xlu0 %1564
      %1566 = vrot.lane.b32.xlu0 %v1522, 8
      %v1567 = vpop.permute.xlu0 %1566
      %1568 = vrot.lane.b32.xlu0 %v1525, 8
      %v1569 = vpop.permute.xlu0 %1568
      %1570 = vrot.lane.b32.xlu0 %v1527, 8
      %v1571 = vpop.permute.xlu0 %1570
      %1572 = vrot.lane.b32.xlu0 %v1530, 8
      %v1573 = vpop.permute.xlu0 %1572
      %1574 = vrot.lane.b32.xlu0 %v1532, 8
      %v1575 = vpop.permute.xlu0 %1574
      %1576 = vrot.lane.b32.xlu0 %v1535, 8
      %v1577 = vpop.permute.xlu0 %1576
      %1578 = vrot.lane.b32.xlu0 %v1537, 8
      %v1579 = vpop.permute.xlu0 %1578
      %1580 = vrot.lane.b32.xlu0 %v1540, 8
      %v1581 = vpop.permute.xlu0 %1580
      %1582 = vrot.lane.b32.xlu0 %v1542, 8
      %v1583 = vpop.permute.xlu0 %1582
      %1584 = vrot.lane.b32.xlu0 %v1545, 8
      %v1585 = vpop.permute.xlu0 %1584
      %1586 = vrot.lane.b32.xlu0 %v1547, 8
      %v1587 = vpop.permute.xlu0 %1586
      %v1608 = vrot.slane %v1438, 2
      %v1609 = vrot.slane %v1439, 2
      %v1610 = vsel %vm754, %v1608, %v1609
      %v1611 = vrot.slane %v1440, 2
      %v1612 = vsel %vm754, %v1609, %v1611
      %v1613 = vrot.slane %v1441, 2
      %v1614 = vrot.slane %v1442, 2
      %v1615 = vsel %vm754, %v1613, %v1614
      %v1616 = vrot.slane %v1443, 2
      %v1617 = vsel %vm754, %v1614, %v1616
      %v1618 = vrot.slane %v1444, 2
      %v1619 = vrot.slane %v1445, 2
      %v1620 = vsel %vm754, %v1618, %v1619
      %v1621 = vrot.slane %v1446, 2
      %v1622 = vsel %vm754, %v1619, %v1621
      %v1623 = vrot.slane %v1447, 2
      %v1624 = vrot.slane %v1448, 2
      %v1625 = vsel %vm754, %v1623, %v1624
      %v1626 = vrot.slane %v1449, 2
      %v1627 = vsel %vm754, %v1624, %v1626
      %v1628 = vrot.slane %v1450, 2
      %v1629 = vrot.slane %v1451, 2
      %v1630 = vsel %vm754, %v1628, %v1629
      %v1631 = vrot.slane %v1452, 2
      %v1632 = vsel %vm754, %v1629, %v1631
      %v1633 = vrot.slane %v1453, 2
      %v1634 = vrot.slane %v1454, 2
      %v1635 = vsel %vm754, %v1633, %v1634
      %v1636 = vrot.slane %v1455, 2
      %v1637 = vsel %vm754, %v1634, %v1636
      %v1638 = vrot.slane %v1456, 2
      %v1639 = vrot.slane %v1457, 2
      %v1640 = vsel %vm754, %v1638, %v1639
      %v1641 = vrot.slane %v1458, 2
      %v1642 = vsel %vm754, %v1639, %v1641
      %v1643 = vrot.slane %v1459, 2
      %v1644 = vrot.slane %v1460, 2
      %v1645 = vsel %vm754, %v1643, %v1644
      %v1646 = vrot.slane %v1461, 2
      %v1647 = vsel %vm754, %v1644, %v1646
      %v1648 = vrot.slane %v1462, 2
      %v1649 = vrot.slane %v1463, 2
      %v1650 = vsel %vm754, %v1648, %v1649
      %v1651 = vrot.slane %v1464, 2
      %v1652 = vsel %vm754, %v1649, %v1651
      %v1653 = vrot.slane %v1465, 2
      %v1654 = vrot.slane %v1466, 2
      %v1655 = vsel %vm754, %v1653, %v1654
      %v1656 = vrot.slane %v1467, 2
      %v1657 = vsel %vm754, %v1654, %v1656
      %1658 = vrot.lane.b32.xlu0 %v1610, 16
      %v1659 = vpop.permute.xlu0 %1658
      %1660 = vrot.lane.b32.xlu0 %v1612, 16
      %v1661 = vpop.permute.xlu0 %1660
      %1662 = vrot.lane.b32.xlu0 %v1615, 16
      %v1663 = vpop.permute.xlu0 %1662
      %1664 = vrot.lane.b32.xlu0 %v1617, 16
      %v1665 = vpop.permute.xlu0 %1664
      %1666 = vrot.lane.b32.xlu0 %v1620, 16
      %v1667 = vpop.permute.xlu0 %1666
      %1668 = vrot.lane.b32.xlu0 %v1622, 16
      %v1669 = vpop.permute.xlu0 %1668
      %1670 = vrot.lane.b32.xlu0 %v1625, 16
      %v1671 = vpop.permute.xlu0 %1670
      %1672 = vrot.lane.b32.xlu0 %v1627, 16
      %v1673 = vpop.permute.xlu0 %1672
      %1674 = vrot.lane.b32.xlu0 %v1630, 16
      %v1675 = vpop.permute.xlu0 %1674
      %1676 = vrot.lane.b32.xlu0 %v1632, 16
      %v1677 = vpop.permute.xlu0 %1676
      %1678 = vrot.lane.b32.xlu0 %v1635, 16
      %v1679 = vpop.permute.xlu0 %1678
      %1680 = vrot.lane.b32.xlu0 %v1637, 16
      %v1681 = vpop.permute.xlu0 %1680
      %1682 = vrot.lane.b32.xlu0 %v1640, 16
      %v1683 = vpop.permute.xlu0 %1682
      %1684 = vrot.lane.b32.xlu0 %v1642, 16
      %v1685 = vpop.permute.xlu0 %1684
      %1686 = vrot.lane.b32.xlu0 %v1645, 16
      %v1687 = vpop.permute.xlu0 %1686
      %1688 = vrot.lane.b32.xlu0 %v1647, 16
      %v1689 = vpop.permute.xlu0 %1688
      %1690 = vrot.lane.b32.xlu0 %v1650, 16
      %v1691 = vpop.permute.xlu0 %1690
      %1692 = vrot.lane.b32.xlu0 %v1652, 16
      %v1693 = vpop.permute.xlu0 %1692
      %1694 = vrot.lane.b32.xlu0 %v1655, 16
      %v1695 = vpop.permute.xlu0 %1694
      %1696 = vrot.lane.b32.xlu0 %v1657, 16
      %v1697 = vpop.permute.xlu0 %1696
      %v1718 = vsel %vm911, %v1438, %v1549
      %v1719 = vsel %vm911, %v1439, %v1551
      %v1720 = vsel %vm911, %v1441, %v1553
      %v1721 = vsel %vm911, %v1442, %v1555
      %v1722 = vsel %vm911, %v1444, %v1557
      %v1723 = vsel %vm911, %v1445, %v1559
      %v1724 = vsel %vm911, %v1447, %v1561
      %v1725 = vsel %vm911, %v1448, %v1563
      %v1726 = vsel %vm911, %v1450, %v1565
      %v1727 = vsel %vm911, %v1451, %v1567
      %v1728 = vsel %vm911, %v1453, %v1569
      %v1729 = vsel %vm911, %v1454, %v1571
      %v1730 = vsel %vm911, %v1456, %v1573
      %v1731 = vsel %vm911, %v1457, %v1575
      %v1732 = vsel %vm911, %v1459, %v1577
      %v1733 = vsel %vm911, %v1460, %v1579
      %v1734 = vsel %vm911, %v1462, %v1581
      %v1735 = vsel %vm911, %v1463, %v1583
      %v1736 = vsel %vm911, %v1465, %v1585
      %v1737 = vsel %vm911, %v1466, %v1587
      %vm1738 = vcmask 130048
      %v1739 = vsel %vm1738, %v1718, %v1659
      %v1740 = vsel %vm1738, %v1719, %v1661
      %v1741 = vsel %vm1738, %v1720, %v1663
      %v1742 = vsel %vm1738, %v1721, %v1665
      %v1743 = vsel %vm1738, %v1722, %v1667
      %v1744 = vsel %vm1738, %v1723, %v1669
      %v1745 = vsel %vm1738, %v1724, %v1671
      %v1746 = vsel %vm1738, %v1725, %v1673
      %v1747 = vsel %vm1738, %v1726, %v1675
      %v1748 = vsel %vm1738, %v1727, %v1677
      %v1749 = vsel %vm1738, %v1728, %v1679
      %v1750 = vsel %vm1738, %v1729, %v1681
      %v1751 = vsel %vm1738, %v1730, %v1683
      %v1752 = vsel %vm1738, %v1731, %v1685
      %v1753 = vsel %vm1738, %v1732, %v1687
      %v1754 = vsel %vm1738, %v1733, %v1689
      %v1755 = vsel %vm1738, %v1734, %v1691
      %v1756 = vsel %vm1738, %v1735, %v1693
      %v1757 = vsel %vm1738, %v1736, %v1695
      %v1758 = vsel %vm1738, %v1737, %v1697
      %1775 = vrot.lane.b32.xlu0 %v1741, 24
      %v1776 = vpop.permute.xlu0 %1775
      %1777 = vrot.lane.b32.xlu0 %v1742, 24
      %v1778 = vpop.permute.xlu0 %1777
      %1779 = vrot.lane.b32.xlu0 %v1743, 24
      %v1780 = vpop.permute.xlu0 %1779
      %1781 = vrot.lane.b32.xlu0 %v1744, 24
      %v1782 = vpop.permute.xlu0 %1781
      %1783 = vrot.lane.b32.xlu0 %v1745, 24
      %v1784 = vpop.permute.xlu0 %1783
      %1785 = vrot.lane.b32.xlu0 %v1746, 24
      %v1786 = vpop.permute.xlu0 %1785
      %1787 = vrot.lane.b32.xlu0 %v1747, 24
      %v1788 = vpop.permute.xlu0 %1787
      %1789 = vrot.lane.b32.xlu0 %v1748, 24
      %v1790 = vpop.permute.xlu0 %1789
      %1791 = vrot.lane.b32.xlu0 %v1749, 24
      %v1792 = vpop.permute.xlu0 %1791
      %1793 = vrot.lane.b32.xlu0 %v1750, 24
      %v1794 = vpop.permute.xlu0 %1793
      %1795 = vrot.lane.b32.xlu0 %v1751, 24
      %v1796 = vpop.permute.xlu0 %1795
      %1797 = vrot.lane.b32.xlu0 %v1752, 24
      %v1798 = vpop.permute.xlu0 %1797
      %1799 = vrot.lane.b32.xlu0 %v1753, 24
      %v1800 = vpop.permute.xlu0 %1799
      %1801 = vrot.lane.b32.xlu0 %v1754, 24
      %v1802 = vpop.permute.xlu0 %1801
      %1803 = vrot.lane.b32.xlu0 %v1755, 24
      %v1804 = vpop.permute.xlu0 %1803
      %1805 = vrot.lane.b32.xlu0 %v1756, 24
      %v1806 = vpop.permute.xlu0 %1805
      %1825 = vrot.lane.b32.xlu0 %v1743, 48
      %v1826 = vpop.permute.xlu0 %1825
      %1827 = vrot.lane.b32.xlu0 %v1744, 48
      %v1828 = vpop.permute.xlu0 %1827
      %1829 = vrot.lane.b32.xlu0 %v1745, 48
      %v1830 = vpop.permute.xlu0 %1829
      %1831 = vrot.lane.b32.xlu0 %v1746, 48
      %v1832 = vpop.permute.xlu0 %1831
      %1833 = vrot.lane.b32.xlu0 %v1747, 48
      %v1834 = vpop.permute.xlu0 %1833
      %1835 = vrot.lane.b32.xlu0 %v1748, 48
      %v1836 = vpop.permute.xlu0 %1835
      %1837 = vrot.lane.b32.xlu0 %v1749, 48
      %v1838 = vpop.permute.xlu0 %1837
      %1839 = vrot.lane.b32.xlu0 %v1750, 48
      %v1840 = vpop.permute.xlu0 %1839
      %1841 = vrot.lane.b32.xlu0 %v1751, 48
      %v1842 = vpop.permute.xlu0 %1841
      %1843 = vrot.lane.b32.xlu0 %v1752, 48
      %v1844 = vpop.permute.xlu0 %1843
      %1845 = vrot.lane.b32.xlu0 %v1753, 48
      %v1846 = vpop.permute.xlu0 %1845
      %1847 = vrot.lane.b32.xlu0 %v1754, 48
      %v1848 = vpop.permute.xlu0 %1847
      %1849 = vrot.lane.b32.xlu0 %v1755, 48
      %v1850 = vpop.permute.xlu0 %1849
      %1851 = vrot.lane.b32.xlu0 %v1756, 48
      %v1852 = vpop.permute.xlu0 %1851
      %1853 = vrot.lane.b32.xlu0 %v1757, 48
      %v1854 = vpop.permute.xlu0 %1853
      %1855 = vrot.lane.b32.xlu0 %v1758, 48
      %v1856 = vpop.permute.xlu0 %1855
      %v1873 = vsel %vm1099, %v1739, %v1776
      %v1874 = vsel %vm1099, %v1740, %v1778
      %v1875 = vsel %vm1099, %v1741, %v1780
      %v1876 = vsel %vm1099, %v1742, %v1782
      %v1877 = vsel %vm1099, %v1743, %v1784
      %v1878 = vsel %vm1099, %v1744, %v1786
      %v1879 = vsel %vm1099, %v1745, %v1788
      %v1880 = vsel %vm1099, %v1746, %v1790
      %v1881 = vsel %vm1099, %v1747, %v1792
      %v1882 = vsel %vm1099, %v1748, %v1794
      %v1883 = vsel %vm1099, %v1749, %v1796
      %v1884 = vsel %vm1099, %v1750, %v1798
      %v1885 = vsel %vm1099, %v1751, %v1800
      %v1886 = vsel %vm1099, %v1752, %v1802
      %v1887 = vsel %vm1099, %v1753, %v1804
      %v1888 = vsel %vm1099, %v1754, %v1806
      %vm1889 = vcmask 392192
      %v1890 = vsel %vm1889, %v1873, %v1826
      %v1891 = vsel %vm1889, %v1874, %v1828
      %v1892 = vsel %vm1889, %v1875, %v1830
      %v1893 = vsel %vm1889, %v1876, %v1832
      %v1894 = vsel %vm1889, %v1877, %v1834
      %v1895 = vsel %vm1889, %v1878, %v1836
      %v1896 = vsel %vm1889, %v1879, %v1838
      %v1897 = vsel %vm1889, %v1880, %v1840
      %v1898 = vsel %vm1889, %v1881, %v1842
      %v1899 = vsel %vm1889, %v1882, %v1844
      %v1900 = vsel %vm1889, %v1883, %v1846
      %v1901 = vsel %vm1889, %v1884, %v1848
      %v1902 = vsel %vm1889, %v1885, %v1850
      %v1903 = vsel %vm1889, %v1886, %v1852
      %v1904 = vsel %vm1889, %v1887, %v1854
      %v1905 = vsel %vm1889, %v1888, %v1856
      %v1906 = vld [vmem:[%s5] sm:$0xff]
      %v1907 = vld [vmem:[%s5 + $0x8] sm:$0xff]
      %v1908 = vld [vmem:[%s5 + $0x10] sm:$0xff]
      %v1909 = vld [vmem:[%s5 + $0x18] sm:$0xff]
      %v1910 = vld [vmem:[%s5 + $0x20] sm:$0xff]
      %v1911 = vld [vmem:[%s5 + $0x28] sm:$0xff]
      %v1912 = vld [vmem:[%s5 + $0x30] sm:$0xff]
      %v1913 = vld [vmem:[%s5 + $0x38] sm:$0xff]
      %v1914 = vld [vmem:[%s5 + $0x40] sm:$0xff]
      %v1915 = vld [vmem:[%s6] sm:$0x1]
      %v1917 = vlaneseq
      %v1918 = vshrl.u32 %v1917, 7
      %v1919 = vsub.s32 0, %v1918
      %v1920 = vrot.slane %v1915, %v1919
      %vm1922 = vcmask 588800
      %v1924 = vsel %vm1922, %v1890, 0
      %v1927 = vsel %vm1922, %v1891, 0
      %v1930 = vsel %vm1922, %v1892, 0
      %v1933 = vsel %vm1922, %v1893, 0
      %v1936 = vsel %vm1922, %v1894, 0
      %v1939 = vsel %vm1922, %v1895, 0
      %v1942 = vsel %vm1922, %v1896, 0
      %v1945 = vsel %vm1922, %v1897, 0
      %v1948 = vsel %vm1922, %v1898, 0
      %v1951 = vsel %vm1922, %v1899, 0
      %v1954 = vsel %vm1922, %v1900, 0
      %v1957 = vsel %vm1922, %v1901, 0
      %v1960 = vsel %vm1922, %v1902, 0
      %v1963 = vsel %vm1922, %v1903, 0
      %v1966 = vsel %vm1922, %v1904, 0
      %v1969 = vsel %vm1922, %v1905, 0
      %1971 = vmatprep.subr.mxu0 0.0
      %1972 = vmatpush1.msra.mxu0 %v1906
      %1973 = vmatprep.subr.mxu0 0.0
      %1974 = vmatpush1.msra.mxu0 %v1907
      %1975 = vmatprep.subr.mxu0 0.0
      %1976 = vmatpush1.msra.mxu0 %v1908
      %1977 = vmatprep.subr.mxu0 0.0
      %1978 = vmatpush1.msra.mxu0 %v1909
      %1979 = vmatprep.subr.mxu0 0.0
      %1980 = vmatpush1.msra.mxu0 %v1910
      %1981 = vmatprep.subr.mxu0 0.0
      %1982 = vmatpush1.msra.mxu0 %v1911
      %1983 = vmatprep.subr.mxu0 0.0
      %1984 = vmatpush1.msra.mxu0 %v1912
      %1985 = vmatprep.subr.mxu0 0.0
      %1986 = vmatpush1.msra.mxu0 %v1913
      %1987 = vmatprep.subr.mxu0 0.0
      %1988 = vmatpush1.msra.mxu0 %v1914
      %1989 = vmatprep.subr.mxu0 0.0
      %1990 = vmatpush1.msra.mxu0 0.0
      %1991 = vmatprep.subr.mxu0 0.0
      %1992 = vmatpush1.msra.mxu0 0.0
      %1993 = vmatprep.subr.mxu0 0.0
      %1994 = vmatpush1.msra.mxu0 0.0
      %1995 = vmatprep.subr.mxu0 0.0
      %1996 = vmatpush1.msra.mxu0 0.0
      %1997 = vmatprep.subr.mxu0 0.0
      %1998 = vmatpush1.msra.mxu0 0.0
      %1999 = vmatprep.subr.mxu0 0.0
      %2000 = vmatpush1.msra.mxu0 0.0
      %2001 = vmatprep.subr.mxu0 0.0
      %2002 = vmatpush1.msra.mxu0 0.0
      %2003 = vmatprep.subr.mxu0 0.0
      %2004 = vmatpush1.msra.mxu0 0.0
      %2005 = vmatprep.subr.mxu0 0.0
      %2006 = vmatpush1.msra.mxu0 0.0
      %2007 = vmatprep.subr.mxu0 0.0
      %2008 = vmatpush1.msra.mxu0 0.0
      %2009 = vmatprep.subr.mxu0 0.0
      %2010 = vmatpush1.msra.mxu0 0.0
      %2011 = vmatprep.subr.mxu0 0.0
      %2012 = vmatpush1.msra.mxu0 0.0
      %2013 = vmatprep.subr.mxu0 0.0
      %2014 = vmatpush1.msra.mxu0 0.0
      %2015 = vmatprep.subr.mxu0 0.0
      %2016 = vmatpush1.msra.mxu0 0.0
      %2017 = vmatprep.subr.mxu0 0.0
      %2018 = vmatpush1.msra.mxu0 0.0
      %2019 = vmatprep.subr.mxu0 0.0
      %2020 = vmatpush1.msra.mxu0 0.0
      %2021 = vmatprep.subr.mxu0 0.0
      %2022 = vmatpush1.msra.mxu0 0.0
      %2023 = vmatprep.subr.mxu0 0.0
      %2024 = vmatpush1.msra.mxu0 0.0
      %2025 = vmatprep.subr.mxu0 0.0
      %2026 = vmatpush1.msra.mxu0 0.0
      %2027 = vmatprep.subr.mxu0 0.0
      %2028 = vmatpush1.msra.mxu0 0.0
      %2029 = vmatprep.subr.mxu0 0.0
      %2030 = vmatpush1.msra.mxu0 0.0
      %2031 = vmatprep.subr.mxu0 0.0
      %2032 = vmatpush1.msra.mxu0 0.0
      %2033 = vmatprep.subr.mxu0 0.0
      %2034 = vmatpush1.msra.mxu0 0.0
      %2035 = vmatprep.mubr.f32.mxu0 0.0
      %2036 = vmatmul.mubr.f32.gmra.mrb[0].mxu0 %v1924
      %v2037 = vpop.f32.mrb[0].mxu0
      %v2038 = vadd.f32 %v1920, %v2037
      %v2039 = vpop.f32.mrb[0].mxu0
      %2040 = vmatprep.mubr.f32.mxu0 0.0
      %2041 = vmatmul.mubr.f32.gmra.mrb[0].mxu0 %v1927
      %v2042 = vpop.f32.mrb[0].mxu0
      %v2043 = vadd.f32 %v1920, %v2042
      %v2044 = vpop.f32.mrb[0].mxu0
      %2045 = vmatprep.mubr.f32.mxu0 0.0
      %2046 = vmatmul.mubr.f32.gmra.mrb[0].mxu0 %v1930
      %v2047 = vpop.f32.mrb[0].mxu0
      %v2048 = vadd.f32 %v1920, %v2047
      %v2049 = vpop.f32.mrb[0].mxu0
      %2050 = vmatprep.mubr.f32.mxu0 0.0
      %2051 = vmatmul.mubr.f32.gmra.mrb[0].mxu0 %v1933
      %v2052 = vpop.f32.mrb[0].mxu0
      %v2053 = vadd.f32 %v1920, %v2052
      %v2054 = vpop.f32.mrb[0].mxu0
      %2055 = vmatprep.mubr.f32.mxu0 0.0
      %2056 = vmatmul.mubr.f32.gmra.mrb[0].mxu0 %v1936
      %v2057 = vpop.f32.mrb[0].mxu0
      %v2058 = vadd.f32 %v1920, %v2057
      %v2059 = vpop.f32.mrb[0].mxu0
      %2060 = vmatprep.mubr.f32.mxu0 0.0
      %2061 = vmatmul.mubr.f32.gmra.mrb[0].mxu0 %v1939
      %v2062 = vpop.f32.mrb[0].mxu0
      %v2063 = vadd.f32 %v1920, %v2062
      %v2064 = vpop.f32.mrb[0].mxu0
      %2065 = vmatprep.mubr.f32.mxu0 0.0
      %2066 = vmatmul.mubr.f32.gmra.mrb[0].mxu0 %v1942
      %v2067 = vpop.f32.mrb[0].mxu0
      %v2068 = vadd.f32 %v1920, %v2067
      %v2069 = vpop.f32.mrb[0].mxu0
      %2070 = vmatprep.mubr.f32.mxu0 0.0
      %2071 = vmatmul.mubr.f32.gmra.mrb[0].mxu0 %v1945
      %v2072 = vpop.f32.mrb[0].mxu0
      %v2073 = vadd.f32 %v1920, %v2072
      %v2074 = vpop.f32.mrb[0].mxu0
      %2075 = vmatprep.mubr.f32.mxu0 0.0
      %2076 = vmatmul.mubr.f32.gmra.mrb[0].mxu0 %v1948
      %v2077 = vpop.f32.mrb[0].mxu0
      %v2078 = vadd.f32 %v1920, %v2077
      %v2079 = vpop.f32.mrb[0].mxu0
      %2080 = vmatprep.mubr.f32.mxu0 0.0
      %2081 = vmatmul.mubr.f32.gmra.mrb[0].mxu0 %v1951
      %v2082 = vpop.f32.mrb[0].mxu0
      %v2083 = vadd.f32 %v1920, %v2082
      %v2084 = vpop.f32.mrb[0].mxu0
      %2085 = vmatprep.mubr.f32.mxu0 0.0
      %2086 = vmatmul.mubr.f32.gmra.mrb[0].mxu0 %v1954
      %v2087 = vpop.f32.mrb[0].mxu0
      %v2088 = vadd.f32 %v1920, %v2087
      %v2089 = vpop.f32.mrb[0].mxu0
      %2090 = vmatprep.mubr.f32.mxu0 0.0
      %2091 = vmatmul.mubr.f32.gmra.mrb[0].mxu0 %v1957
      %v2092 = vpop.f32.mrb[0].mxu0
      %v2093 = vadd.f32 %v1920, %v2092
      %v2094 = vpop.f32.mrb[0].mxu0
      %2095 = vmatprep.mubr.f32.mxu0 0.0
      %2096 = vmatmul.mubr.f32.gmra.mrb[0].mxu0 %v1960
      %v2097 = vpop.f32.mrb[0].mxu0
      %v2098 = vadd.f32 %v1920, %v2097
      %v2099 = vpop.f32.mrb[0].mxu0
      %2100 = vmatprep.mubr.f32.mxu0 0.0
      %2101 = vmatmul.mubr.f32.gmra.mrb[0].mxu0 %v1963
      %v2102 = vpop.f32.mrb[0].mxu0
      %v2103 = vadd.f32 %v1920, %v2102
      %v2104 = vpop.f32.mrb[0].mxu0
      %2105 = vmatprep.mubr.f32.mxu0 0.0
      %2106 = vmatmul.mubr.f32.gmra.mrb[0].mxu0 %v1966
      %v2107 = vpop.f32.mrb[0].mxu0
      %v2108 = vadd.f32 %v1920, %v2107
      %v2109 = vpop.f32.mrb[0].mxu0
      %2110 = vmatprep.mubr.f32.mxu0 0.0
      %2111 = vmatmul.mubr.f32.gmra.mrb[0].mxu0 %v1969
      %v2112 = vpop.f32.mrb[0].mxu0
      %v2113 = vadd.f32 %v1920, %v2112
      %v2114 = vpop.f32.mrb[0].mxu0
      %2115 = vdwg.mxu0
      %v2116 = vmax.f32 %v2038, 0.0
      %v2117 = vmax.f32 %v2043, 0.0
      %v2118 = vmax.f32 %v2048, 0.0
      %v2119 = vmax.f32 %v2053, 0.0
      %v2120 = vmax.f32 %v2058, 0.0
      %v2121 = vmax.f32 %v2063, 0.0
      %v2122 = vmax.f32 %v2068, 0.0
      %v2123 = vmax.f32 %v2073, 0.0
      %v2124 = vmax.f32 %v2078, 0.0
      %v2125 = vmax.f32 %v2083, 0.0
      %v2126 = vmax.f32 %v2088, 0.0
      %v2127 = vmax.f32 %v2093, 0.0
      %v2128 = vmax.f32 %v2098, 0.0
      %v2129 = vmax.f32 %v2103, 0.0
      %v2130 = vmax.f32 %v2108, 0.0
      %v2131 = vmax.f32 %v2113, 0.0
      %2132 = vst.msk [vmem:[%s455] sm:$0xff] %vm911, %v2116
      %2133 = vst.msk [vmem:[%s455 + $0x8] sm:$0xff] %vm911, %v2117
      %2134 = vst.msk [vmem:[%s455 + $0x10] sm:$0xff] %vm911, %v2118
      %2135 = vst.msk [vmem:[%s455 + $0x18] sm:$0xff] %vm911, %v2119
      %2136 = vst.msk [vmem:[%s455 + $0x20] sm:$0xff] %vm911, %v2120
      %2137 = vst.msk [vmem:[%s455 + $0x28] sm:$0xff] %vm911, %v2121
      %2138 = vst.msk [vmem:[%s455 + $0x30] sm:$0xff] %vm911, %v2122
      %2139 = vst.msk [vmem:[%s455 + $0x38] sm:$0xff] %vm911, %v2123
      %2140 = vst.msk [vmem:[%s455 + $0x40] sm:$0xff] %vm911, %v2124
      %2141 = vst.msk [vmem:[%s455 + $0x48] sm:$0xff] %vm911, %v2125
      %2142 = vst.msk [vmem:[%s455 + $0x50] sm:$0xff] %vm911, %v2126
      %2143 = vst.msk [vmem:[%s455 + $0x58] sm:$0xff] %vm911, %v2127
      %2144 = vst.msk [vmem:[%s455 + $0x60] sm:$0xff] %vm911, %v2128
      %2145 = vst.msk [vmem:[%s455 + $0x68] sm:$0xff] %vm911, %v2129
      %2146 = vst.msk [vmem:[%s455 + $0x70] sm:$0xff] %vm911, %v2130
      %2147 = vst.msk [vmem:[%s455 + $0x78] sm:$0xff] %vm911, %v2131
      %s2148 = smul.u32 8, %s23
      %p2149 = scmp.lt.s32.totalorder %s22, 1
      %s2150 = scalar_select %p2149, %s22, 1
      %p2151 = scmp.lt.s32.totalorder %s2148, 15
      %s2152 = scalar_select %p2151, %s2148, 15
      %s2153 = smul.addr %s2152, 2
      %s2154 = smul.addr %s2150, 32
      %s2155 = sadd.s32 %s2153, %s2154
      %s2156 = smul.addr %s2155, 8
      %s2157 = scalar_lea.vmem %s7, %s2156
      // Predicated region
      $region65: #{double_conv_pallas.1} parent=47 // pred_check
        %p2158 = pneg %p234
      $region66: #{double_conv_pallas.1} parent=47 // pred_check_branch
        %2160 = sbr.rel (%p2158) target = $region68
      $region67: #{double_conv_pallas.1} parent=47 // pred_region
        %s2161 = smul.u32 8, %s23
      $region68: #{double_conv_pallas.1} parent=47 // pred_fallthru
        _
    $region48: #{double_conv_pallas.1} parent=5 // pred_fallthru
      _
    %p2162 = scmp.le.s32.totalorder 2, %s13
    // Predicated region
    $region69: #{double_conv_pallas.1} parent=5 // pred_check
      %p2163 = pneg %p2162
    $region70: #{double_conv_pallas.1} parent=5 // pred_check_branch
      %2165 = sbr.rel (%p2163) target = $region72
    $region71: #{double_conv_pallas.1} parent=5 // pred_region
      %s2166 = ssub.s32 %s13, 2
      // Predicated region
      $region73: #{double_conv_pallas.1} parent=71 // pred_check
        %p2167 = pneg %p240
      $region74: #{double_conv_pallas.1} parent=71 // pred_check_branch
        %2169 = sbr.rel (%p2167) target = $region76
      $region75: #{double_conv_pallas.1} parent=71 // pred_region
        %s2170 = smul.u32 8, %s25
        %p2171 = scmp.lt.s32.totalorder %s24, 1
        %s2172 = scalar_select %p2171, %s24, 1
        %p2173 = scmp.lt.s32.totalorder %s2170, 15
        %s2174 = scalar_select %p2173, %s2170, 15
        %s2175 = smul.addr %s2174, 2
        %s2176 = smul.addr %s2172, 32
        %s2177 = sadd.s32 %s2175, %s2176
        %s2178 = smul.addr %s2177, 8
        %s2179 = scalar_lea.vmem %s7, %s2178
      $region76: #{double_conv_pallas.1} parent=71 // pred_fallthru
        _
    $region72: #{double_conv_pallas.1} parent=5 // pred_fallthru
      _
  $region6: #{double_conv_pallas.1} parent=0 // loop_footer
    %s17 = sadd.s32 1, %s13
  $region7: #{double_conv_pallas.1} parent=0 // loop_footer_branch
    %12 = sbr.rel target = $region3
  $region8: #{double_conv_pallas.1} parent=0 // loop_exit
    _

</llo_original>
